<compile_context>
chip_gen: v5e
topology: v5e:2x2
jax: 0.10.0
libtpu: 0.0.40
codegen_flags: <defaults>
</compile_context>

<pallas_src>
import functools

import jax
import jax.numpy as jnp
import numpy as np
from jax.experimental import pallas as pl
from jax.experimental.pallas import tpu as pltpu

BN_EPS = 1e-5


# ------------------------------ Pallas kernel -------------------------------

def _relu_bn(y, gamma, beta):
    # (bias already folded into the matmul) -> ReLU -> BatchNorm2d (training):
    # per-channel stats over the M = N*H*W (lane) axis, biased centered var.
    y = jnp.maximum(y, 0.0)
    mean = jnp.mean(y, axis=1, keepdims=True)
    d = y - mean
    var = jnp.mean(d * d, axis=1, keepdims=True)
    return gamma * d * jax.lax.rsqrt(var + BN_EPS) + beta


def _inception_kernel(H, W, out1, mid13p, mid15p,
                      x_ref, wh_ref, gh_ref, beh_ref,
                      w3_ref, g3_ref, be3_ref,
                      w5_ref, g5_ref, be5_ref,
                      wp_ref, gp_ref, bep_ref,
                      out_ref):
    x = x_ref[...]                      # (Cin, M), M = N*H*W on the lane axis
    M = x.shape[1]
    f32 = jnp.float32
    ones_blk = jnp.ones((8, M), f32)    # bias block appended to every dot rhs

    # ---- spatial coordinates & validity masks, computed ONCE ----------------
    m_idx = jax.lax.broadcasted_iota(jnp.int32, (1, M), 1)
    if (W & (W - 1)) == 0 and (H & (H - 1)) == 0:
        w_idx = m_idx & (W - 1)
        h_idx = (m_idx >> (W.bit_length() - 1)) & (H - 1)
    else:
        w_idx = m_idx % W
        h_idx = (m_idx // W) % H

    def _h_valid(dh):
        if dh < 0:
            return h_idx >= -dh
        if dh > 0:
            return h_idx < H - dh
        return None

    def _w_valid(dw):
        if dw < 0:
            return w_idx >= -dw
        if dw > 0:
            return w_idx < W - dw
        return None

    hv = {d: _h_valid(d) for d in range(-2, 3)}
    wv = {d: _w_valid(d) for d in range(-2, 3)}
    mask_cache = {}

    def tap_mask(dh, dw):
        key = (dh, dw)
        if key not in mask_cache:
            mh, mw = hv[dh], wv[dw]
            if mh is None:
                m = mw
            elif mw is None:
                m = mh
            else:
                m = jnp.logical_and(mh, mw)
            mask_cache[key] = m
        return mask_cache[key]

    def shifted(v, s):
        # tap(s)[m] == v[m + s]
        return v if s == 0 else pltpu.roll(v, (-s) % M, axis=1)

    def tap(v, dh, dw, fill):
        t = shifted(v, dh * W + dw)
        m = tap_mask(dh, dw)
        return t if m is None else jnp.where(m, t, fill)

    # ---- fused 1x1 head: conv1 | conv13-reduce | conv15-reduce --------------
    zh = _relu_bn(
        jnp.dot(wh_ref[...], jnp.concatenate([x, ones_blk], axis=0),
                preferred_element_type=f32),
        gh_ref[...], beh_ref[...])
    y1 = zh[0:out1, :]
    m2 = zh[out1:out1 + mid13p, :]                      # 8-aligned, zero-padded
    m3 = zh[out1 + mid13p:out1 + mid13p + mid15p, :]    # 8-aligned, zero-padded

    # ---- branch 2: 3x3 conv (pad 1) as ONE dot over a (9*mid13p + 8, M) slab
    slab3 = jnp.concatenate(
        [tap(m2, dh, dw, 0.0) for dh in (-1, 0, 1) for dw in (-1, 0, 1)]
        + [ones_blk], axis=0)
    y2 = _relu_bn(jnp.dot(w3_ref[...], slab3, preferred_element_type=f32),
                  g3_ref[...], be3_ref[...])

    # ---- branch 3: 5x5 conv (pad 2) as ONE dot over a (25*mid15p + 8, M) slab
    slab5 = jnp.concatenate(
        [tap(m3, dh, dw, 0.0) for dh in range(-2, 3) for dw in range(-2, 3)]
        + [ones_blk], axis=0)
    y3 = _relu_bn(jnp.dot(w5_ref[...], slab5, preferred_element_type=f32),
                  g5_ref[...], be5_ref[...])

    # ---- branch 4: separable 3x3/s1/p1 max-pool + 1x1 conv ------------------
    neg_inf = jnp.float32(-jnp.inf)
    rowmax = jnp.maximum(x, jnp.where(wv[-1], shifted(x, -1), neg_inf))
    rowmax = jnp.maximum(rowmax, jnp.where(wv[1], shifted(x, 1), neg_inf))
    pooled = jnp.maximum(rowmax, jnp.where(hv[-1], shifted(rowmax, -W), neg_inf))
    pooled = jnp.maximum(pooled, jnp.where(hv[1], shifted(rowmax, W), neg_inf))
    y4 = _relu_bn(
        jnp.dot(wp_ref[...], jnp.concatenate([pooled, ones_blk], axis=0),
                preferred_element_type=f32),
        gp_ref[...], bep_ref[...])

    # ---- write each branch straight into its lane-dense output slice --------
    o1 = out1
    o2 = o1 + y2.shape[0]
    o3 = o2 + y3.shape[0]
    out_ref[0:o1, :] = y1.astype(out_ref.dtype)
    out_ref[o1:o2, :] = y2.astype(out_ref.dtype)
    out_ref[o2:o3, :] = y3.astype(out_ref.dtype)
    out_ref[o3:o3 + y4.shape[0], :] = y4.astype(out_ref.dtype)


# ------------------------------ parameters ----------------------------------

def _conv_params(key, K, cin, cout):
    # Weight layout: (Cout, K*K*Cin) with flat index [(dh*K + dw)*Cin + cin],
    # matching the in-kernel tap ordering. bias / gamma / beta: (Cout, 1).
    k1, k2, k3, k4 = jax.random.split(key, 4)
    return dict(
        w=0.1 * jax.random.normal(k1, (cout, K * K * cin), jnp.float32),
        b=0.1 * jax.random.normal(k2, (cout, 1), jnp.float32),
        g=1.0 + 0.1 * jax.random.normal(k3, (cout, 1), jnp.float32),
        be=0.1 * jax.random.normal(k4, (cout, 1), jnp.float32),
    )


def init_inception_params(key, in_ch, out_ch1, mid13, out13, mid15, out15, out_pool):
    ks = jax.random.split(key, 6)
    return dict(
        b1=_conv_params(ks[0], 1, in_ch, out_ch1),
        b2a=_conv_params(ks[1], 1, in_ch, mid13),
        b2b=_conv_params(ks[2], 3, mid13, out13),
        b3a=_conv_params(ks[3], 1, in_ch, mid15),
        b3b=_conv_params(ks[4], 5, mid15, out15),
        b4=_conv_params(ks[5], 1, in_ch, out_pool),
    )


# ------------------------------ forward (Pallas) -----------------------------

def _round_up8(c):
    return ((c + 7) // 8) * 8


def _pad_rows(a, rows_to):
    return a if a.shape[0] == rows_to else jnp.pad(a, ((0, rows_to - a.shape[0]), (0, 0)))


def _pad_taps_cin(w, K, cin, cin_pad):
    # (Cout, K*K*cin) -> (Cout, K*K*cin_pad) with zero columns per tap so each
    # im2col tap block is 8-sublane aligned.
    if cin_pad == cin:
        return w
    cout = w.shape[0]
    wr = w.reshape(cout, K * K, cin)
    wr = jnp.pad(wr, ((0, 0), (0, 0), (0, cin_pad - cin)))
    return wr.reshape(cout, K * K * cin_pad)


def _fold_bias(w, b):
    # Matches the all-ones (8, M) block appended to every dot's rhs in-kernel:
    # extra columns = [bias, 0, 0, 0, 0, 0, 0, 0].
    return jnp.concatenate([w, b, jnp.zeros((w.shape[0], 7), w.dtype)], axis=1)


def inception_forward(params, x_nchw):
    N, Cin, H, W = x_nchw.shape
    M = N * H * W
    # NCHW -> (Cin, M): leading-dim transpose only (cheap XLA relayout).
    x_t = jnp.transpose(x_nchw, (1, 0, 2, 3)).reshape(Cin, M)

    b1, b2a, b2b = params["b1"], params["b2a"], params["b2b"]
    b3a, b3b, b4 = params["b3a"], params["b3b"], params["b4"]

    out1 = b1["w"].shape[0]
    mid13, out13 = b2a["w"].shape[0], b2b["w"].shape[0]
    mid15, out15 = b3a["w"].shape[0], b3b["w"].shape[0]
    outp = b4["w"].shape[0]
    c_total = out1 + out13 + out15 + outp

    # Pad reduce-channel counts up to multiples of 8 (sublane alignment).
    mid13p, mid15p = _round_up8(mid13), _round_up8(mid15)

    # Fused, padded 1x1 head: [branch1 | 3x3-reduce (padded) | 5x5-reduce (padded)].
    # Padded rows get zero weight/bias/gamma/beta -> their outputs are exactly 0.
    wh = jnp.concatenate([b1["w"], _pad_rows(b2a["w"], mid13p), _pad_rows(b3a["w"], mid15p)], axis=0)
    bh = jnp.concatenate([b1["b"], _pad_rows(b2a["b"], mid13p), _pad_rows(b3a["b"], mid15p)], axis=0)
    gh = jnp.concatenate([b1["g"], _pad_rows(b2a["g"], mid13p), _pad_rows(b3a["g"], mid15p)], axis=0)
    beh = jnp.concatenate([b1["be"], _pad_rows(b2a["be"], mid13p), _pad_rows(b3a["be"], mid15p)], axis=0)

    wh_a = _fold_bias(wh, bh)
    w3_a = _fold_bias(_pad_taps_cin(b2b["w"], 3, mid13, mid13p), b2b["b"])
    w5_a = _fold_bias(_pad_taps_cin(b3b["w"], 5, mid15, mid15p), b3b["b"])
    wp_a = _fold_bias(b4["w"], b4["b"])

    vmem = pl.BlockSpec(memory_space=pltpu.MemorySpace.VMEM)
    kernel = functools.partial(_inception_kernel, H, W, out1, mid13p, mid15p)
    out_t = pl.pallas_call(
        kernel,
        out_shape=jax.ShapeDtypeStruct((c_total, M), jnp.float32),
        in_specs=[vmem] * 13,
        out_specs=vmem,
    )(x_t, wh_a, gh, beh,
      w3_a, b2b["g"], b2b["be"],
      w5_a, b3b["g"], b3b["be"],
      wp_a, b4["g"], b4["be"])

    # (C_total, M) -> NCHW
    return jnp.transpose(out_t.reshape(c_total, N, H, W), (1, 0, 2, 3))


# ------------------------------ pure-JAX reference ---------------------------

def _ref_conv_relu_bn(x_nhwc, p, K):
    cout = p["w"].shape[0]
    cin = p["w"].shape[1] // (K * K)
    w_hwio = p["w"].reshape(cout, K, K, cin).transpose(1, 2, 3, 0)
    pad = K // 2
    y = jax.lax.conv_general_dilated(
        x_nhwc, w_hwio, (1, 1), [(pad, pad), (pad, pad)],
        dimension_numbers=("NHWC", "HWIO", "NHWC")) + p["b"].reshape(1, 1, 1, -1)
    y = jnp.maximum(y, 0.0)
    mean = jnp.mean(y, axis=(0, 1, 2), keepdims=True)
    var = jnp.mean((y - mean) ** 2, axis=(0, 1, 2), keepdims=True)
    return (p["g"].reshape(1, 1, 1, -1) * (y - mean) * jax.lax.rsqrt(var + BN_EPS)
            + p["be"].reshape(1, 1, 1, -1))


def _ref_maxpool3(x_nhwc):
    return jax.lax.reduce_window(x_nhwc, -jnp.inf, jax.lax.max, (1, 3, 3, 1),
                                 (1, 1, 1, 1), [(0, 0), (1, 1), (1, 1), (0, 0)])


def inception_ref(params, x_nchw):
    x = jnp.transpose(x_nchw, (0, 2, 3, 1))
    y1 = _ref_conv_relu_bn(x, params["b1"], 1)
    y2 = _ref_conv_relu_bn(_ref_conv_relu_bn(x, params["b2a"], 1), params["b2b"], 3)
    y3 = _ref_conv_relu_bn(_ref_conv_relu_bn(x, params["b3a"], 1), params["b3b"], 5)
    y4 = _ref_conv_relu_bn(_ref_maxpool3(x), params["b4"], 1)
    out = jnp.concatenate([y1, y2, y3, y4], axis=-1)
    return jnp.transpose(out, (0, 3, 1, 2))


# ------------------------------ main -----------------------------------------

if __name__ == "__main__":
    # mid15 = 4 deliberately exercises the 8-sublane padding path.
    in_ch, out_ch1, mid13, out13, mid15, out15, out_pool = 8, 8, 8, 16, 4, 8, 8
    N, H, W = 2, 16, 16

    key = jax.random.PRNGKey(0)
    kp, kx = jax.random.split(key)
    params = init_inception_params(kp, in_ch, out_ch1, mid13, out13, mid15, out15, out_pool)
    x = jax.random.normal(kx, (N, in_ch, H, W), jnp.float32)

    fwd = jax.jit(functools.partial(inception_forward, params))
    out = jax.block_until_ready(fwd(x))

    assert out.shape == (N, out_ch1 + out13 + out15 + out_pool, H, W), out.shape

    ref = jax.block_until_ready(inception_ref(params, x))
    np.testing.assert_allclose(np.asarray(out), np.asarray(ref), rtol=2e-2, atol=2e-2)

    print("KERNEL_OK")
</pallas_src>

<mosaic_0001>
module attributes {stable_mosaic.version = 11 : i64} {
  func.func @_inception_kernel(%arg0: memref<8x512xf32, #tpu.memory_space<vmem>>, %arg1: memref<24x16xf32, #tpu.memory_space<vmem>>, %arg2: memref<24x1xf32, #tpu.memory_space<vmem>>, %arg3: memref<24x1xf32, #tpu.memory_space<vmem>>, %arg4: memref<16x80xf32, #tpu.memory_space<vmem>>, %arg5: memref<16x1xf32, #tpu.memory_space<vmem>>, %arg6: memref<16x1xf32, #tpu.memory_space<vmem>>, %arg7: memref<8x208xf32, #tpu.memory_space<vmem>>, %arg8: memref<8x1xf32, #tpu.memory_space<vmem>>, %arg9: memref<8x1xf32, #tpu.memory_space<vmem>>, %arg10: memref<8x16xf32, #tpu.memory_space<vmem>>, %arg11: memref<8x1xf32, #tpu.memory_space<vmem>>, %arg12: memref<8x1xf32, #tpu.memory_space<vmem>>, %arg13: memref<40x512xf32, #tpu.memory_space<vmem>>) attributes {dimension_semantics = [], scalar_prefetch = 0 : i64, scratch_operands = 0 : i64, tpu.core_type = #tpu.core_type<tc>} {
    %c0 = arith.constant 0 : index
    %c0_0 = arith.constant 0 : index
    %0 = vector.load %arg0[%c0, %c0_0] : memref<8x512xf32, #tpu.memory_space<vmem>>, vector<8x512xf32>
    %cst = arith.constant 1.000000e+00 : f32
    %1 = vector.broadcast %cst : f32 to vector<8x512xf32>
    %2 = tpu.iota {dimensions = array<i32: 1>} : vector<1x512xi32>
    %c15_i32 = arith.constant 15 : i32
    %3 = vector.broadcast %c15_i32 : i32 to vector<1x512xi32>
    %4 = arith.andi %2, %3 : vector<1x512xi32>
    %c4_i32 = arith.constant 4 : i32
    %5 = vector.broadcast %c4_i32 : i32 to vector<1x512xi32>
    %6 = arith.shrsi %2, %5 : vector<1x512xi32>
    %c15_i32_1 = arith.constant 15 : i32
    %7 = vector.broadcast %c15_i32_1 : i32 to vector<1x512xi32>
    %8 = arith.andi %6, %7 : vector<1x512xi32>
    %c2_i32 = arith.constant 2 : i32
    %9 = vector.broadcast %c2_i32 : i32 to vector<1x512xi32>
    %10 = arith.cmpi sge, %8, %9 : vector<1x512xi32>
    %c1_i32 = arith.constant 1 : i32
    %11 = vector.broadcast %c1_i32 : i32 to vector<1x512xi32>
    %12 = arith.cmpi sge, %8, %11 : vector<1x512xi32>
    %c15_i32_2 = arith.constant 15 : i32
    %13 = vector.broadcast %c15_i32_2 : i32 to vector<1x512xi32>
    %14 = arith.cmpi slt, %8, %13 : vector<1x512xi32>
    %c14_i32 = arith.constant 14 : i32
    %15 = vector.broadcast %c14_i32 : i32 to vector<1x512xi32>
    %16 = arith.cmpi slt, %8, %15 : vector<1x512xi32>
    %c2_i32_3 = arith.constant 2 : i32
    %17 = vector.broadcast %c2_i32_3 : i32 to vector<1x512xi32>
    %18 = arith.cmpi sge, %4, %17 : vector<1x512xi32>
    %c1_i32_4 = arith.constant 1 : i32
    %19 = vector.broadcast %c1_i32_4 : i32 to vector<1x512xi32>
    %20 = arith.cmpi sge, %4, %19 : vector<1x512xi32>
    %c15_i32_5 = arith.constant 15 : i32
    %21 = vector.broadcast %c15_i32_5 : i32 to vector<1x512xi32>
    %22 = arith.cmpi slt, %4, %21 : vector<1x512xi32>
    %c14_i32_6 = arith.constant 14 : i32
    %23 = vector.broadcast %c14_i32_6 : i32 to vector<1x512xi32>
    %24 = arith.cmpi slt, %4, %23 : vector<1x512xi32>
    %c0_7 = arith.constant 0 : index
    %c0_8 = arith.constant 0 : index
    %25 = vector.load %arg1[%c0_7, %c0_8] : memref<24x16xf32, #tpu.memory_space<vmem>>, vector<24x16xf32>
    %26 = tpu.concatenate %0, %1 in 0 : vector<8x512xf32>, vector<8x512xf32> -> vector<16x512xf32>
    %cst_9 = arith.constant dense<0.000000e+00> : vector<24x512xf32>
    %27 = tpu.matmul %25, %26, %cst_9 {dimension_numbers = #tpu.dot_dimension_numbers<[1], [0], [0], [1], [0, 0, 1, 1], [], []>} : vector<24x16xf32>, vector<16x512xf32>, vector<24x512xf32> -> vector<24x512xf32>
    %c0_10 = arith.constant 0 : index
    %c0_11 = arith.constant 0 : index
    %28 = vector.load %arg2[%c0_10, %c0_11] : memref<24x1xf32, #tpu.memory_space<vmem>>, vector<24x1xf32>
    %c0_12 = arith.constant 0 : index
    %c0_13 = arith.constant 0 : index
    %29 = vector.load %arg3[%c0_12, %c0_13] : memref<24x1xf32, #tpu.memory_space<vmem>>, vector<24x1xf32>
    %cst_14 = arith.constant 0.000000e+00 : f32
    %30 = vector.broadcast %cst_14 : f32 to vector<24x512xf32>
    %31 = arith.maximumf %27, %30 : vector<24x512xf32>
    %cst_15 = arith.constant dense<0.000000e+00> : vector<24xf32>
    %32 = vector.multi_reduction <add>, %31, %cst_15 [1] : vector<24x512xf32> to vector<24xf32>
    %33 = vector.shape_cast %32 : vector<24xf32> to vector<24x1xf32>
    %cst_16 = arith.constant 5.120000e+02 : f32
    %34 = vector.broadcast %cst_16 : f32 to vector<24x1xf32>
    %35 = arith.divf %33, %34 : vector<24x1xf32>
    %36 = vector.broadcast %35 : vector<24x1xf32> to vector<24x512xf32>
    %37 = arith.subf %31, %36 : vector<24x512xf32>
    %38 = arith.mulf %37, %37 : vector<24x512xf32>
    %cst_17 = arith.constant dense<0.000000e+00> : vector<24xf32>
    %39 = vector.multi_reduction <add>, %38, %cst_17 [1] : vector<24x512xf32> to vector<24xf32>
    %40 = vector.shape_cast %39 : vector<24xf32> to vector<24x1xf32>
    %cst_18 = arith.constant 5.120000e+02 : f32
    %41 = vector.broadcast %cst_18 : f32 to vector<24x1xf32>
    %42 = arith.divf %40, %41 : vector<24x1xf32>
    %43 = vector.broadcast %28 : vector<24x1xf32> to vector<24x512xf32>
    %44 = arith.mulf %43, %37 : vector<24x512xf32>
    %cst_19 = arith.constant 9.99999974E-6 : f32
    %45 = vector.broadcast %cst_19 : f32 to vector<24x1xf32>
    %46 = arith.addf %42, %45 : vector<24x1xf32>
    %47 = math.rsqrt %46 : vector<24x1xf32>
    %48 = vector.broadcast %47 : vector<24x1xf32> to vector<24x512xf32>
    %49 = arith.mulf %44, %48 : vector<24x512xf32>
    %50 = vector.broadcast %29 : vector<24x1xf32> to vector<24x512xf32>
    %51 = arith.addf %49, %50 : vector<24x512xf32>
    %52 = vector.extract_strided_slice %51 {offsets = [0, 0], sizes = [8, 512], strides = [1, 1]} : vector<24x512xf32> to vector<8x512xf32>
    %53 = vector.extract_strided_slice %51 {offsets = [8, 0], sizes = [8, 512], strides = [1, 1]} : vector<24x512xf32> to vector<8x512xf32>
    %54 = vector.extract_strided_slice %51 {offsets = [16, 0], sizes = [8, 512], strides = [1, 1]} : vector<24x512xf32> to vector<8x512xf32>
    %c17_i32 = arith.constant 17 : i32
    %55 = tpu.dynamic_rotate %53 by %c17_i32 dim 1 : vector<8x512xf32>, i32 -> vector<8x512xf32>
    %56 = arith.andi %12, %20 : vector<1x512xi1>
    %cst_20 = arith.constant 0.000000e+00 : f32
    %57 = vector.shape_cast %56 : vector<1x512xi1> to vector<1x512xi1>
    %58 = vector.broadcast %57 : vector<1x512xi1> to vector<8x512xi1>
    %59 = vector.broadcast %cst_20 : f32 to vector<8x512xf32>
    %60 = arith.select %58, %55, %59 : vector<8x512xi1>, vector<8x512xf32>
    %c16_i32 = arith.constant 16 : i32
    %61 = tpu.dynamic_rotate %53 by %c16_i32 dim 1 : vector<8x512xf32>, i32 -> vector<8x512xf32>
    %cst_21 = arith.constant 0.000000e+00 : f32
    %62 = vector.shape_cast %12 : vector<1x512xi1> to vector<1x512xi1>
    %63 = vector.broadcast %62 : vector<1x512xi1> to vector<8x512xi1>
    %64 = vector.broadcast %cst_21 : f32 to vector<8x512xf32>
    %65 = arith.select %63, %61, %64 : vector<8x512xi1>, vector<8x512xf32>
    %c15_i32_22 = arith.constant 15 : i32
    %66 = tpu.dynamic_rotate %53 by %c15_i32_22 dim 1 : vector<8x512xf32>, i32 -> vector<8x512xf32>
    %67 = arith.andi %12, %22 : vector<1x512xi1>
    %cst_23 = arith.constant 0.000000e+00 : f32
    %68 = vector.shape_cast %67 : vector<1x512xi1> to vector<1x512xi1>
    %69 = vector.broadcast %68 : vector<1x512xi1> to vector<8x512xi1>
    %70 = vector.broadcast %cst_23 : f32 to vector<8x512xf32>
    %71 = arith.select %69, %66, %70 : vector<8x512xi1>, vector<8x512xf32>
    %c1_i32_24 = arith.constant 1 : i32
    %72 = tpu.dynamic_rotate %53 by %c1_i32_24 dim 1 : vector<8x512xf32>, i32 -> vector<8x512xf32>
    %cst_25 = arith.constant 0.000000e+00 : f32
    %73 = vector.shape_cast %20 : vector<1x512xi1> to vector<1x512xi1>
    %74 = vector.broadcast %73 : vector<1x512xi1> to vector<8x512xi1>
    %75 = vector.broadcast %cst_25 : f32 to vector<8x512xf32>
    %76 = arith.select %74, %72, %75 : vector<8x512xi1>, vector<8x512xf32>
    %c511_i32 = arith.constant 511 : i32
    %77 = tpu.dynamic_rotate %53 by %c511_i32 dim 1 : vector<8x512xf32>, i32 -> vector<8x512xf32>
    %cst_26 = arith.constant 0.000000e+00 : f32
    %78 = vector.shape_cast %22 : vector<1x512xi1> to vector<1x512xi1>
    %79 = vector.broadcast %78 : vector<1x512xi1> to vector<8x512xi1>
    %80 = vector.broadcast %cst_26 : f32 to vector<8x512xf32>
    %81 = arith.select %79, %77, %80 : vector<8x512xi1>, vector<8x512xf32>
    %c497_i32 = arith.constant 497 : i32
    %82 = tpu.dynamic_rotate %53 by %c497_i32 dim 1 : vector<8x512xf32>, i32 -> vector<8x512xf32>
    %83 = arith.andi %14, %20 : vector<1x512xi1>
    %cst_27 = arith.constant 0.000000e+00 : f32
    %84 = vector.shape_cast %83 : vector<1x512xi1> to vector<1x512xi1>
    %85 = vector.broadcast %84 : vector<1x512xi1> to vector<8x512xi1>
    %86 = vector.broadcast %cst_27 : f32 to vector<8x512xf32>
    %87 = arith.select %85, %82, %86 : vector<8x512xi1>, vector<8x512xf32>
    %c496_i32 = arith.constant 496 : i32
    %88 = tpu.dynamic_rotate %53 by %c496_i32 dim 1 : vector<8x512xf32>, i32 -> vector<8x512xf32>
    %cst_28 = arith.constant 0.000000e+00 : f32
    %89 = vector.shape_cast %14 : vector<1x512xi1> to vector<1x512xi1>
    %90 = vector.broadcast %89 : vector<1x512xi1> to vector<8x512xi1>
    %91 = vector.broadcast %cst_28 : f32 to vector<8x512xf32>
    %92 = arith.select %90, %88, %91 : vector<8x512xi1>, vector<8x512xf32>
    %c495_i32 = arith.constant 495 : i32
    %93 = tpu.dynamic_rotate %53 by %c495_i32 dim 1 : vector<8x512xf32>, i32 -> vector<8x512xf32>
    %94 = arith.andi %14, %22 : vector<1x512xi1>
    %cst_29 = arith.constant 0.000000e+00 : f32
    %95 = vector.shape_cast %94 : vector<1x512xi1> to vector<1x512xi1>
    %96 = vector.broadcast %95 : vector<1x512xi1> to vector<8x512xi1>
    %97 = vector.broadcast %cst_29 : f32 to vector<8x512xf32>
    %98 = arith.select %96, %93, %97 : vector<8x512xi1>, vector<8x512xf32>
    %99 = tpu.concatenate %60, %65, %71, %76, %53, %81, %87, %92, %98, %1 in 0 : vector<8x512xf32>, vector<8x512xf32>, vector<8x512xf32>, vector<8x512xf32>, vector<8x512xf32>, vector<8x512xf32>, vector<8x512xf32>, vector<8x512xf32>, vector<8x512xf32>, vector<8x512xf32> -> vector<80x512xf32>
    %c0_30 = arith.constant 0 : index
    %c0_31 = arith.constant 0 : index
    %100 = vector.load %arg4[%c0_30, %c0_31] : memref<16x80xf32, #tpu.memory_space<vmem>>, vector<16x80xf32>
    %cst_32 = arith.constant dense<0.000000e+00> : vector<16x512xf32>
    %101 = tpu.matmul %100, %99, %cst_32 {dimension_numbers = #tpu.dot_dimension_numbers<[1], [0], [0], [1], [0, 0, 1, 1], [], []>} : vector<16x80xf32>, vector<80x512xf32>, vector<16x512xf32> -> vector<16x512xf32>
    %c0_33 = arith.constant 0 : index
    %c0_34 = arith.constant 0 : index
    %102 = vector.load %arg5[%c0_33, %c0_34] : memref<16x1xf32, #tpu.memory_space<vmem>>, vector<16x1xf32>
    %c0_35 = arith.constant 0 : index
    %c0_36 = arith.constant 0 : index
    %103 = vector.load %arg6[%c0_35, %c0_36] : memref<16x1xf32, #tpu.memory_space<vmem>>, vector<16x1xf32>
    %cst_37 = arith.constant 0.000000e+00 : f32
    %104 = vector.broadcast %cst_37 : f32 to vector<16x512xf32>
    %105 = arith.maximumf %101, %104 : vector<16x512xf32>
    %cst_38 = arith.constant dense<0.000000e+00> : vector<16xf32>
    %106 = vector.multi_reduction <add>, %105, %cst_38 [1] : vector<16x512xf32> to vector<16xf32>
    %107 = vector.shape_cast %106 : vector<16xf32> to vector<16x1xf32>
    %cst_39 = arith.constant 5.120000e+02 : f32
    %108 = vector.broadcast %cst_39 : f32 to vector<16x1xf32>
    %109 = arith.divf %107, %108 : vector<16x1xf32>
    %110 = vector.broadcast %109 : vector<16x1xf32> to vector<16x512xf32>
    %111 = arith.subf %105, %110 : vector<16x512xf32>
    %112 = arith.mulf %111, %111 : vector<16x512xf32>
    %cst_40 = arith.constant dense<0.000000e+00> : vector<16xf32>
    %113 = vector.multi_reduction <add>, %112, %cst_40 [1] : vector<16x512xf32> to vector<16xf32>
    %114 = vector.shape_cast %113 : vector<16xf32> to vector<16x1xf32>
    %cst_41 = arith.constant 5.120000e+02 : f32
    %115 = vector.broadcast %cst_41 : f32 to vector<16x1xf32>
    %116 = arith.divf %114, %115 : vector<16x1xf32>
    %117 = vector.broadcast %102 : vector<16x1xf32> to vector<16x512xf32>
    %118 = arith.mulf %117, %111 : vector<16x512xf32>
    %cst_42 = arith.constant 9.99999974E-6 : f32
    %119 = vector.broadcast %cst_42 : f32 to vector<16x1xf32>
    %120 = arith.addf %116, %119 : vector<16x1xf32>
    %121 = math.rsqrt %120 : vector<16x1xf32>
    %122 = vector.broadcast %121 : vector<16x1xf32> to vector<16x512xf32>
    %123 = arith.mulf %118, %122 : vector<16x512xf32>
    %124 = vector.broadcast %103 : vector<16x1xf32> to vector<16x512xf32>
    %125 = arith.addf %123, %124 : vector<16x512xf32>
    %c34_i32 = arith.constant 34 : i32
    %126 = tpu.dynamic_rotate %54 by %c34_i32 dim 1 : vector<8x512xf32>, i32 -> vector<8x512xf32>
    %127 = arith.andi %10, %18 : vector<1x512xi1>
    %cst_43 = arith.constant 0.000000e+00 : f32
    %128 = vector.shape_cast %127 : vector<1x512xi1> to vector<1x512xi1>
    %129 = vector.broadcast %128 : vector<1x512xi1> to vector<8x512xi1>
    %130 = vector.broadcast %cst_43 : f32 to vector<8x512xf32>
    %131 = arith.select %129, %126, %130 : vector<8x512xi1>, vector<8x512xf32>
    %c33_i32 = arith.constant 33 : i32
    %132 = tpu.dynamic_rotate %54 by %c33_i32 dim 1 : vector<8x512xf32>, i32 -> vector<8x512xf32>
    %133 = arith.andi %10, %20 : vector<1x512xi1>
    %cst_44 = arith.constant 0.000000e+00 : f32
    %134 = vector.shape_cast %133 : vector<1x512xi1> to vector<1x512xi1>
    %135 = vector.broadcast %134 : vector<1x512xi1> to vector<8x512xi1>
    %136 = vector.broadcast %cst_44 : f32 to vector<8x512xf32>
    %137 = arith.select %135, %132, %136 : vector<8x512xi1>, vector<8x512xf32>
    %c32_i32 = arith.constant 32 : i32
    %138 = tpu.dynamic_rotate %54 by %c32_i32 dim 1 : vector<8x512xf32>, i32 -> vector<8x512xf32>
    %cst_45 = arith.constant 0.000000e+00 : f32
    %139 = vector.shape_cast %10 : vector<1x512xi1> to vector<1x512xi1>
    %140 = vector.broadcast %139 : vector<1x512xi1> to vector<8x512xi1>
    %141 = vector.broadcast %cst_45 : f32 to vector<8x512xf32>
    %142 = arith.select %140, %138, %141 : vector<8x512xi1>, vector<8x512xf32>
    %c31_i32 = arith.constant 31 : i32
    %143 = tpu.dynamic_rotate %54 by %c31_i32 dim 1 : vector<8x512xf32>, i32 -> vector<8x512xf32>
    %144 = arith.andi %10, %22 : vector<1x512xi1>
    %cst_46 = arith.constant 0.000000e+00 : f32
    %145 = vector.shape_cast %144 : vector<1x512xi1> to vector<1x512xi1>
    %146 = vector.broadcast %145 : vector<1x512xi1> to vector<8x512xi1>
    %147 = vector.broadcast %cst_46 : f32 to vector<8x512xf32>
    %148 = arith.select %146, %143, %147 : vector<8x512xi1>, vector<8x512xf32>
    %c30_i32 = arith.constant 30 : i32
    %149 = tpu.dynamic_rotate %54 by %c30_i32 dim 1 : vector<8x512xf32>, i32 -> vector<8x512xf32>
    %150 = arith.andi %10, %24 : vector<1x512xi1>
    %cst_47 = arith.constant 0.000000e+00 : f32
    %151 = vector.shape_cast %150 : vector<1x512xi1> to vector<1x512xi1>
    %152 = vector.broadcast %151 : vector<1x512xi1> to vector<8x512xi1>
    %153 = vector.broadcast %cst_47 : f32 to vector<8x512xf32>
    %154 = arith.select %152, %149, %153 : vector<8x512xi1>, vector<8x512xf32>
    %c18_i32 = arith.constant 18 : i32
    %155 = tpu.dynamic_rotate %54 by %c18_i32 dim 1 : vector<8x512xf32>, i32 -> vector<8x512xf32>
    %156 = arith.andi %12, %18 : vector<1x512xi1>
    %cst_48 = arith.constant 0.000000e+00 : f32
    %157 = vector.shape_cast %156 : vector<1x512xi1> to vector<1x512xi1>
    %158 = vector.broadcast %157 : vector<1x512xi1> to vector<8x512xi1>
    %159 = vector.broadcast %cst_48 : f32 to vector<8x512xf32>
    %160 = arith.select %158, %155, %159 : vector<8x512xi1>, vector<8x512xf32>
    %c17_i32_49 = arith.constant 17 : i32
    %161 = tpu.dynamic_rotate %54 by %c17_i32_49 dim 1 : vector<8x512xf32>, i32 -> vector<8x512xf32>
    %cst_50 = arith.constant 0.000000e+00 : f32
    %162 = vector.shape_cast %56 : vector<1x512xi1> to vector<1x512xi1>
    %163 = vector.broadcast %162 : vector<1x512xi1> to vector<8x512xi1>
    %164 = vector.broadcast %cst_50 : f32 to vector<8x512xf32>
    %165 = arith.select %163, %161, %164 : vector<8x512xi1>, vector<8x512xf32>
    %c16_i32_51 = arith.constant 16 : i32
    %166 = tpu.dynamic_rotate %54 by %c16_i32_51 dim 1 : vector<8x512xf32>, i32 -> vector<8x512xf32>
    %cst_52 = arith.constant 0.000000e+00 : f32
    %167 = vector.shape_cast %12 : vector<1x512xi1> to vector<1x512xi1>
    %168 = vector.broadcast %167 : vector<1x512xi1> to vector<8x512xi1>
    %169 = vector.broadcast %cst_52 : f32 to vector<8x512xf32>
    %170 = arith.select %168, %166, %169 : vector<8x512xi1>, vector<8x512xf32>
    %c15_i32_53 = arith.constant 15 : i32
    %171 = tpu.dynamic_rotate %54 by %c15_i32_53 dim 1 : vector<8x512xf32>, i32 -> vector<8x512xf32>
    %cst_54 = arith.constant 0.000000e+00 : f32
    %172 = vector.shape_cast %67 : vector<1x512xi1> to vector<1x512xi1>
    %173 = vector.broadcast %172 : vector<1x512xi1> to vector<8x512xi1>
    %174 = vector.broadcast %cst_54 : f32 to vector<8x512xf32>
    %175 = arith.select %173, %171, %174 : vector<8x512xi1>, vector<8x512xf32>
    %c14_i32_55 = arith.constant 14 : i32
    %176 = tpu.dynamic_rotate %54 by %c14_i32_55 dim 1 : vector<8x512xf32>, i32 -> vector<8x512xf32>
    %177 = arith.andi %12, %24 : vector<1x512xi1>
    %cst_56 = arith.constant 0.000000e+00 : f32
    %178 = vector.shape_cast %177 : vector<1x512xi1> to vector<1x512xi1>
    %179 = vector.broadcast %178 : vector<1x512xi1> to vector<8x512xi1>
    %180 = vector.broadcast %cst_56 : f32 to vector<8x512xf32>
    %181 = arith.select %179, %176, %180 : vector<8x512xi1>, vector<8x512xf32>
    %c2_i32_57 = arith.constant 2 : i32
    %182 = tpu.dynamic_rotate %54 by %c2_i32_57 dim 1 : vector<8x512xf32>, i32 -> vector<8x512xf32>
    %cst_58 = arith.constant 0.000000e+00 : f32
    %183 = vector.shape_cast %18 : vector<1x512xi1> to vector<1x512xi1>
    %184 = vector.broadcast %183 : vector<1x512xi1> to vector<8x512xi1>
    %185 = vector.broadcast %cst_58 : f32 to vector<8x512xf32>
    %186 = arith.select %184, %182, %185 : vector<8x512xi1>, vector<8x512xf32>
    %c1_i32_59 = arith.constant 1 : i32
    %187 = tpu.dynamic_rotate %54 by %c1_i32_59 dim 1 : vector<8x512xf32>, i32 -> vector<8x512xf32>
    %cst_60 = arith.constant 0.000000e+00 : f32
    %188 = vector.shape_cast %20 : vector<1x512xi1> to vector<1x512xi1>
    %189 = vector.broadcast %188 : vector<1x512xi1> to vector<8x512xi1>
    %190 = vector.broadcast %cst_60 : f32 to vector<8x512xf32>
    %191 = arith.select %189, %187, %190 : vector<8x512xi1>, vector<8x512xf32>
    %c511_i32_61 = arith.constant 511 : i32
    %192 = tpu.dynamic_rotate %54 by %c511_i32_61 dim 1 : vector<8x512xf32>, i32 -> vector<8x512xf32>
    %cst_62 = arith.constant 0.000000e+00 : f32
    %193 = vector.shape_cast %22 : vector<1x512xi1> to vector<1x512xi1>
    %194 = vector.broadcast %193 : vector<1x512xi1> to vector<8x512xi1>
    %195 = vector.broadcast %cst_62 : f32 to vector<8x512xf32>
    %196 = arith.select %194, %192, %195 : vector<8x512xi1>, vector<8x512xf32>
    %c510_i32 = arith.constant 510 : i32
    %197 = tpu.dynamic_rotate %54 by %c510_i32 dim 1 : vector<8x512xf32>, i32 -> vector<8x512xf32>
    %cst_63 = arith.constant 0.000000e+00 : f32
    %198 = vector.shape_cast %24 : vector<1x512xi1> to vector<1x512xi1>
    %199 = vector.broadcast %198 : vector<1x512xi1> to vector<8x512xi1>
    %200 = vector.broadcast %cst_63 : f32 to vector<8x512xf32>
    %201 = arith.select %199, %197, %200 : vector<8x512xi1>, vector<8x512xf32>
    %c498_i32 = arith.constant 498 : i32
    %202 = tpu.dynamic_rotate %54 by %c498_i32 dim 1 : vector<8x512xf32>, i32 -> vector<8x512xf32>
    %203 = arith.andi %14, %18 : vector<1x512xi1>
    %cst_64 = arith.constant 0.000000e+00 : f32
    %204 = vector.shape_cast %203 : vector<1x512xi1> to vector<1x512xi1>
    %205 = vector.broadcast %204 : vector<1x512xi1> to vector<8x512xi1>
    %206 = vector.broadcast %cst_64 : f32 to vector<8x512xf32>
    %207 = arith.select %205, %202, %206 : vector<8x512xi1>, vector<8x512xf32>
    %c497_i32_65 = arith.constant 497 : i32
    %208 = tpu.dynamic_rotate %54 by %c497_i32_65 dim 1 : vector<8x512xf32>, i32 -> vector<8x512xf32>
    %cst_66 = arith.constant 0.000000e+00 : f32
    %209 = vector.shape_cast %83 : vector<1x512xi1> to vector<1x512xi1>
    %210 = vector.broadcast %209 : vector<1x512xi1> to vector<8x512xi1>
    %211 = vector.broadcast %cst_66 : f32 to vector<8x512xf32>
    %212 = arith.select %210, %208, %211 : vector<8x512xi1>, vector<8x512xf32>
    %c496_i32_67 = arith.constant 496 : i32
    %213 = tpu.dynamic_rotate %54 by %c496_i32_67 dim 1 : vector<8x512xf32>, i32 -> vector<8x512xf32>
    %cst_68 = arith.constant 0.000000e+00 : f32
    %214 = vector.shape_cast %14 : vector<1x512xi1> to vector<1x512xi1>
    %215 = vector.broadcast %214 : vector<1x512xi1> to vector<8x512xi1>
    %216 = vector.broadcast %cst_68 : f32 to vector<8x512xf32>
    %217 = arith.select %215, %213, %216 : vector<8x512xi1>, vector<8x512xf32>
    %c495_i32_69 = arith.constant 495 : i32
    %218 = tpu.dynamic_rotate %54 by %c495_i32_69 dim 1 : vector<8x512xf32>, i32 -> vector<8x512xf32>
    %cst_70 = arith.constant 0.000000e+00 : f32
    %219 = vector.shape_cast %94 : vector<1x512xi1> to vector<1x512xi1>
    %220 = vector.broadcast %219 : vector<1x512xi1> to vector<8x512xi1>
    %221 = vector.broadcast %cst_70 : f32 to vector<8x512xf32>
    %222 = arith.select %220, %218, %221 : vector<8x512xi1>, vector<8x512xf32>
    %c494_i32 = arith.constant 494 : i32
    %223 = tpu.dynamic_rotate %54 by %c494_i32 dim 1 : vector<8x512xf32>, i32 -> vector<8x512xf32>
    %224 = arith.andi %14, %24 : vector<1x512xi1>
    %cst_71 = arith.constant 0.000000e+00 : f32
    %225 = vector.shape_cast %224 : vector<1x512xi1> to vector<1x512xi1>
    %226 = vector.broadcast %225 : vector<1x512xi1> to vector<8x512xi1>
    %227 = vector.broadcast %cst_71 : f32 to vector<8x512xf32>
    %228 = arith.select %226, %223, %227 : vector<8x512xi1>, vector<8x512xf32>
    %c482_i32 = arith.constant 482 : i32
    %229 = tpu.dynamic_rotate %54 by %c482_i32 dim 1 : vector<8x512xf32>, i32 -> vector<8x512xf32>
    %230 = arith.andi %16, %18 : vector<1x512xi1>
    %cst_72 = arith.constant 0.000000e+00 : f32
    %231 = vector.shape_cast %230 : vector<1x512xi1> to vector<1x512xi1>
    %232 = vector.broadcast %231 : vector<1x512xi1> to vector<8x512xi1>
    %233 = vector.broadcast %cst_72 : f32 to vector<8x512xf32>
    %234 = arith.select %232, %229, %233 : vector<8x512xi1>, vector<8x512xf32>
    %c481_i32 = arith.constant 481 : i32
    %235 = tpu.dynamic_rotate %54 by %c481_i32 dim 1 : vector<8x512xf32>, i32 -> vector<8x512xf32>
    %236 = arith.andi %16, %20 : vector<1x512xi1>
    %cst_73 = arith.constant 0.000000e+00 : f32
    %237 = vector.shape_cast %236 : vector<1x512xi1> to vector<1x512xi1>
    %238 = vector.broadcast %237 : vector<1x512xi1> to vector<8x512xi1>
    %239 = vector.broadcast %cst_73 : f32 to vector<8x512xf32>
    %240 = arith.select %238, %235, %239 : vector<8x512xi1>, vector<8x512xf32>
    %c480_i32 = arith.constant 480 : i32
    %241 = tpu.dynamic_rotate %54 by %c480_i32 dim 1 : vector<8x512xf32>, i32 -> vector<8x512xf32>
    %cst_74 = arith.constant 0.000000e+00 : f32
    %242 = vector.shape_cast %16 : vector<1x512xi1> to vector<1x512xi1>
    %243 = vector.broadcast %242 : vector<1x512xi1> to vector<8x512xi1>
    %244 = vector.broadcast %cst_74 : f32 to vector<8x512xf32>
    %245 = arith.select %243, %241, %244 : vector<8x512xi1>, vector<8x512xf32>
    %c479_i32 = arith.constant 479 : i32
    %246 = tpu.dynamic_rotate %54 by %c479_i32 dim 1 : vector<8x512xf32>, i32 -> vector<8x512xf32>
    %247 = arith.andi %16, %22 : vector<1x512xi1>
    %cst_75 = arith.constant 0.000000e+00 : f32
    %248 = vector.shape_cast %247 : vector<1x512xi1> to vector<1x512xi1>
    %249 = vector.broadcast %248 : vector<1x512xi1> to vector<8x512xi1>
    %250 = vector.broadcast %cst_75 : f32 to vector<8x512xf32>
    %251 = arith.select %249, %246, %250 : vector<8x512xi1>, vector<8x512xf32>
    %c478_i32 = arith.constant 478 : i32
    %252 = tpu.dynamic_rotate %54 by %c478_i32 dim 1 : vector<8x512xf32>, i32 -> vector<8x512xf32>
    %253 = arith.andi %16, %24 : vector<1x512xi1>
    %cst_76 = arith.constant 0.000000e+00 : f32
    %254 = vector.shape_cast %253 : vector<1x512xi1> to vector<1x512xi1>
    %255 = vector.broadcast %254 : vector<1x512xi1> to vector<8x512xi1>
    %256 = vector.broadcast %cst_76 : f32 to vector<8x512xf32>
    %257 = arith.select %255, %252, %256 : vector<8x512xi1>, vector<8x512xf32>
    %258 = tpu.concatenate %131, %137, %142, %148, %154, %160, %165, %170, %175, %181, %186, %191, %54, %196, %201, %207 in 0 : vector<8x512xf32>, vector<8x512xf32>, vector<8x512xf32>, vector<8x512xf32>, vector<8x512xf32>, vector<8x512xf32>, vector<8x512xf32>, vector<8x512xf32>, vector<8x512xf32>, vector<8x512xf32>, vector<8x512xf32>, vector<8x512xf32>, vector<8x512xf32>, vector<8x512xf32>, vector<8x512xf32>, vector<8x512xf32> -> vector<128x512xf32>
    %259 = tpu.concatenate %212, %217, %222, %228, %234, %240, %245, %251, %257, %1 in 0 : vector<8x512xf32>, vector<8x512xf32>, vector<8x512xf32>, vector<8x512xf32>, vector<8x512xf32>, vector<8x512xf32>, vector<8x512xf32>, vector<8x512xf32>, vector<8x512xf32>, vector<8x512xf32> -> vector<80x512xf32>
    %260 = tpu.concatenate %258, %259 in 0 : vector<128x512xf32>, vector<80x512xf32> -> vector<208x512xf32>
    %c0_77 = arith.constant 0 : index
    %c0_78 = arith.constant 0 : index
    %261 = vector.load %arg7[%c0_77, %c0_78] : memref<8x208xf32, #tpu.memory_space<vmem>>, vector<8x208xf32>
    %cst_79 = arith.constant dense<0.000000e+00> : vector<8x512xf32>
    %262 = tpu.matmul %261, %260, %cst_79 {dimension_numbers = #tpu.dot_dimension_numbers<[1], [0], [0], [1], [0, 0, 1, 1], [], []>} : vector<8x208xf32>, vector<208x512xf32>, vector<8x512xf32> -> vector<8x512xf32>
    %c0_80 = arith.constant 0 : index
    %c0_81 = arith.constant 0 : index
    %263 = vector.load %arg8[%c0_80, %c0_81] : memref<8x1xf32, #tpu.memory_space<vmem>>, vector<8x1xf32>
    %c0_82 = arith.constant 0 : index
    %c0_83 = arith.constant 0 : index
    %264 = vector.load %arg9[%c0_82, %c0_83] : memref<8x1xf32, #tpu.memory_space<vmem>>, vector<8x1xf32>
    %cst_84 = arith.constant 0.000000e+00 : f32
    %265 = vector.broadcast %cst_84 : f32 to vector<8x512xf32>
    %266 = arith.maximumf %262, %265 : vector<8x512xf32>
    %cst_85 = arith.constant dense<0.000000e+00> : vector<8xf32>
    %267 = vector.multi_reduction <add>, %266, %cst_85 [1] : vector<8x512xf32> to vector<8xf32>
    %268 = vector.shape_cast %267 : vector<8xf32> to vector<8x1xf32>
    %cst_86 = arith.constant 5.120000e+02 : f32
    %269 = vector.broadcast %cst_86 : f32 to vector<8x1xf32>
    %270 = arith.divf %268, %269 : vector<8x1xf32>
    %271 = vector.broadcast %270 : vector<8x1xf32> to vector<8x512xf32>
    %272 = arith.subf %266, %271 : vector<8x512xf32>
    %273 = arith.mulf %272, %272 : vector<8x512xf32>
    %cst_87 = arith.constant dense<0.000000e+00> : vector<8xf32>
    %274 = vector.multi_reduction <add>, %273, %cst_87 [1] : vector<8x512xf32> to vector<8xf32>
    %275 = vector.shape_cast %274 : vector<8xf32> to vector<8x1xf32>
    %cst_88 = arith.constant 5.120000e+02 : f32
    %276 = vector.broadcast %cst_88 : f32 to vector<8x1xf32>
    %277 = arith.divf %275, %276 : vector<8x1xf32>
    %278 = vector.broadcast %263 : vector<8x1xf32> to vector<8x512xf32>
    %279 = arith.mulf %278, %272 : vector<8x512xf32>
    %cst_89 = arith.constant 9.99999974E-6 : f32
    %280 = vector.broadcast %cst_89 : f32 to vector<8x1xf32>
    %281 = arith.addf %277, %280 : vector<8x1xf32>
    %282 = math.rsqrt %281 : vector<8x1xf32>
    %283 = vector.broadcast %282 : vector<8x1xf32> to vector<8x512xf32>
    %284 = arith.mulf %279, %283 : vector<8x512xf32>
    %285 = vector.broadcast %264 : vector<8x1xf32> to vector<8x512xf32>
    %286 = arith.addf %284, %285 : vector<8x512xf32>
    %c1_i32_90 = arith.constant 1 : i32
    %287 = tpu.dynamic_rotate %0 by %c1_i32_90 dim 1 : vector<8x512xf32>, i32 -> vector<8x512xf32>
    %cst_91 = arith.constant 0xFF800000 : f32
    %288 = vector.shape_cast %20 : vector<1x512xi1> to vector<1x512xi1>
    %289 = vector.broadcast %288 : vector<1x512xi1> to vector<8x512xi1>
    %290 = vector.broadcast %cst_91 : f32 to vector<8x512xf32>
    %291 = arith.select %289, %287, %290 : vector<8x512xi1>, vector<8x512xf32>
    %292 = arith.maximumf %0, %291 : vector<8x512xf32>
    %c511_i32_92 = arith.constant 511 : i32
    %293 = tpu.dynamic_rotate %0 by %c511_i32_92 dim 1 : vector<8x512xf32>, i32 -> vector<8x512xf32>
    %cst_93 = arith.constant 0xFF800000 : f32
    %294 = vector.shape_cast %22 : vector<1x512xi1> to vector<1x512xi1>
    %295 = vector.broadcast %294 : vector<1x512xi1> to vector<8x512xi1>
    %296 = vector.broadcast %cst_93 : f32 to vector<8x512xf32>
    %297 = arith.select %295, %293, %296 : vector<8x512xi1>, vector<8x512xf32>
    %298 = arith.maximumf %292, %297 : vector<8x512xf32>
    %c16_i32_94 = arith.constant 16 : i32
    %299 = tpu.dynamic_rotate %298 by %c16_i32_94 dim 1 : vector<8x512xf32>, i32 -> vector<8x512xf32>
    %cst_95 = arith.constant 0xFF800000 : f32
    %300 = vector.shape_cast %12 : vector<1x512xi1> to vector<1x512xi1>
    %301 = vector.broadcast %300 : vector<1x512xi1> to vector<8x512xi1>
    %302 = vector.broadcast %cst_95 : f32 to vector<8x512xf32>
    %303 = arith.select %301, %299, %302 : vector<8x512xi1>, vector<8x512xf32>
    %304 = arith.maximumf %298, %303 : vector<8x512xf32>
    %c496_i32_96 = arith.constant 496 : i32
    %305 = tpu.dynamic_rotate %298 by %c496_i32_96 dim 1 : vector<8x512xf32>, i32 -> vector<8x512xf32>
    %cst_97 = arith.constant 0xFF800000 : f32
    %306 = vector.shape_cast %14 : vector<1x512xi1> to vector<1x512xi1>
    %307 = vector.broadcast %306 : vector<1x512xi1> to vector<8x512xi1>
    %308 = vector.broadcast %cst_97 : f32 to vector<8x512xf32>
    %309 = arith.select %307, %305, %308 : vector<8x512xi1>, vector<8x512xf32>
    %310 = arith.maximumf %304, %309 : vector<8x512xf32>
    %c0_98 = arith.constant 0 : index
    %c0_99 = arith.constant 0 : index
    %311 = vector.load %arg10[%c0_98, %c0_99] : memref<8x16xf32, #tpu.memory_space<vmem>>, vector<8x16xf32>
    %312 = tpu.concatenate %310, %1 in 0 : vector<8x512xf32>, vector<8x512xf32> -> vector<16x512xf32>
    %cst_100 = arith.constant dense<0.000000e+00> : vector<8x512xf32>
    %313 = tpu.matmul %311, %312, %cst_100 {dimension_numbers = #tpu.dot_dimension_numbers<[1], [0], [0], [1], [0, 0, 1, 1], [], []>} : vector<8x16xf32>, vector<16x512xf32>, vector<8x512xf32> -> vector<8x512xf32>
    %c0_101 = arith.constant 0 : index
    %c0_102 = arith.constant 0 : index
    %314 = vector.load %arg11[%c0_101, %c0_102] : memref<8x1xf32, #tpu.memory_space<vmem>>, vector<8x1xf32>
    %c0_103 = arith.constant 0 : index
    %c0_104 = arith.constant 0 : index
    %315 = vector.load %arg12[%c0_103, %c0_104] : memref<8x1xf32, #tpu.memory_space<vmem>>, vector<8x1xf32>
    %cst_105 = arith.constant 0.000000e+00 : f32
    %316 = vector.broadcast %cst_105 : f32 to vector<8x512xf32>
    %317 = arith.maximumf %313, %316 : vector<8x512xf32>
    %cst_106 = arith.constant dense<0.000000e+00> : vector<8xf32>
    %318 = vector.multi_reduction <add>, %317, %cst_106 [1] : vector<8x512xf32> to vector<8xf32>
    %319 = vector.shape_cast %318 : vector<8xf32> to vector<8x1xf32>
    %cst_107 = arith.constant 5.120000e+02 : f32
    %320 = vector.broadcast %cst_107 : f32 to vector<8x1xf32>
    %321 = arith.divf %319, %320 : vector<8x1xf32>
    %322 = vector.broadcast %321 : vector<8x1xf32> to vector<8x512xf32>
    %323 = arith.subf %317, %322 : vector<8x512xf32>
    %324 = arith.mulf %323, %323 : vector<8x512xf32>
    %cst_108 = arith.constant dense<0.000000e+00> : vector<8xf32>
    %325 = vector.multi_reduction <add>, %324, %cst_108 [1] : vector<8x512xf32> to vector<8xf32>
    %326 = vector.shape_cast %325 : vector<8xf32> to vector<8x1xf32>
    %cst_109 = arith.constant 5.120000e+02 : f32
    %327 = vector.broadcast %cst_109 : f32 to vector<8x1xf32>
    %328 = arith.divf %326, %327 : vector<8x1xf32>
    %329 = vector.broadcast %314 : vector<8x1xf32> to vector<8x512xf32>
    %330 = arith.mulf %329, %323 : vector<8x512xf32>
    %cst_110 = arith.constant 9.99999974E-6 : f32
    %331 = vector.broadcast %cst_110 : f32 to vector<8x1xf32>
    %332 = arith.addf %328, %331 : vector<8x1xf32>
    %333 = math.rsqrt %332 : vector<8x1xf32>
    %334 = vector.broadcast %333 : vector<8x1xf32> to vector<8x512xf32>
    %335 = arith.mulf %330, %334 : vector<8x512xf32>
    %336 = vector.broadcast %315 : vector<8x1xf32> to vector<8x512xf32>
    %337 = arith.addf %335, %336 : vector<8x512xf32>
    %c0_111 = arith.constant 0 : index
    %c0_112 = arith.constant 0 : index
    %338 = vector.load %arg13[%c0_111, %c0_112] : memref<40x512xf32, #tpu.memory_space<vmem>>, vector<8x512xf32>
    tpu.vector_store %arg13[%c0_111, %c0_112], %52 {strides = array<i32>} : memref<40x512xf32, #tpu.memory_space<vmem>>, vector<8x512xf32>,
    %c8 = arith.constant 8 : index
    %c0_113 = arith.constant 0 : index
    %339 = vector.load %arg13[%c8, %c0_113] : memref<40x512xf32, #tpu.memory_space<vmem>>, vector<16x512xf32>
    tpu.vector_store %arg13[%c8, %c0_113], %125 {strides = array<i32>} : memref<40x512xf32, #tpu.memory_space<vmem>>, vector<16x512xf32>,
    %c24 = arith.constant 24 : index
    %c0_114 = arith.constant 0 : index
    %340 = vector.load %arg13[%c24, %c0_114] : memref<40x512xf32, #tpu.memory_space<vmem>>, vector<8x512xf32>
    tpu.vector_store %arg13[%c24, %c0_114], %286 {strides = array<i32>} : memref<40x512xf32, #tpu.memory_space<vmem>>, vector<8x512xf32>,
    %c32 = arith.constant 32 : index
    %c0_115 = arith.constant 0 : index
    %341 = vector.load %arg13[%c32, %c0_115] : memref<40x512xf32, #tpu.memory_space<vmem>>, vector<8x512xf32>
    tpu.vector_store %arg13[%c32, %c0_115], %337 {strides = array<i32>} : memref<40x512xf32, #tpu.memory_space<vmem>>, vector<8x512xf32>,
    return
  }
}

</mosaic_0001>

<llo_original>
// kernel: inception_forward.1
$region0: #{inception_forward.1}
  #allocation0 [shape = 'u32[]', space=smem, size = 0x4, offset = 0x4, fixed_abs, tag = 'smem constant byte address 0x4 - core index']
  #allocation1 [shape = 'u32[72,128]{1,0:T(1,128)}', space=vmem, size = 0x9000, scoped, tag = 'internal scratch']
  %s0 = inlined_call_operand.vmem [shape: f32[8,512], index: 0, kind: input, shape index: {}]
  %s1 = inlined_call_operand.vmem [shape: f32[24,16], index: 1, kind: input, shape index: {}]
  %s2 = inlined_call_operand.vmem [shape: f32[24,1], index: 2, kind: input, shape index: {}]
  %s3 = inlined_call_operand.vmem [shape: f32[24,1], index: 3, kind: input, shape index: {}]
  %s4 = inlined_call_operand.vmem [shape: f32[16,80], index: 4, kind: input, shape index: {}]
  %s5 = inlined_call_operand.vmem [shape: f32[16,1], index: 5, kind: input, shape index: {}]
  %s6 = inlined_call_operand.vmem [shape: f32[16,1], index: 6, kind: input, shape index: {}]
  %s7 = inlined_call_operand.vmem [shape: f32[8,208], index: 7, kind: input, shape index: {}]
  %s8 = inlined_call_operand.vmem [shape: f32[8,1], index: 8, kind: input, shape index: {}]
  %s9 = inlined_call_operand.vmem [shape: f32[8,1], index: 9, kind: input, shape index: {}]
  %s10 = inlined_call_operand.vmem [shape: f32[8,16], index: 10, kind: input, shape index: {}]
  %s11 = inlined_call_operand.vmem [shape: f32[8,1], index: 11, kind: input, shape index: {}]
  %s12 = inlined_call_operand.vmem [shape: f32[8,1], index: 12, kind: input, shape index: {}]
  %s13 = inlined_call_operand.vmem [shape: f32[40,512], index: 13, kind: output, shape index: {}]
  %s14 = sld [smem:[#allocation0]]
  $region62: #{inception_forward.1} parent=0
    _
  %s16 = ssub.s32 1, %s14
  %s17 = scalar_select 0, %s16, %s14
  // Predicated region
  $region2: #{inception_forward.1} parent=0 // pred_check
    _
  $region3: #{inception_forward.1} parent=0 // pred_check_branch
    %19 = sbr.rel (0) target = $region5
  $region4: #{inception_forward.1} parent=0 // pred_region
    _
  $region5: #{inception_forward.1} parent=0 // pred_fallthru
    _
  // Predicated region
  $region6: #{inception_forward.1} parent=0 // pred_check
    _
  $region7: #{inception_forward.1} parent=0 // pred_check_branch
    %21 = sbr.rel (0) target = $region9
  $region8: #{inception_forward.1} parent=0 // pred_region
    _
  $region9: #{inception_forward.1} parent=0 // pred_fallthru
    _
  // Predicated region
  $region10: #{inception_forward.1} parent=0 // pred_check
    _
  $region11: #{inception_forward.1} parent=0 // pred_check_branch
    %23 = sbr.rel (0) target = $region13
  $region12: #{inception_forward.1} parent=0 // pred_region
    _
  $region13: #{inception_forward.1} parent=0 // pred_fallthru
    _
  // Predicated region
  $region14: #{inception_forward.1} parent=0 // pred_check
    _
  $region15: #{inception_forward.1} parent=0 // pred_check_branch
    %25 = sbr.rel (0) target = $region17
  $region16: #{inception_forward.1} parent=0 // pred_region
    _
  $region17: #{inception_forward.1} parent=0 // pred_fallthru
    _
  // Predicated region
  $region18: #{inception_forward.1} parent=0 // pred_check
    _
  $region19: #{inception_forward.1} parent=0 // pred_check_branch
    %27 = sbr.rel (0) target = $region21
  $region20: #{inception_forward.1} parent=0 // pred_region
    _
  $region21: #{inception_forward.1} parent=0 // pred_fallthru
    _
  // Predicated region
  $region22: #{inception_forward.1} parent=0 // pred_check
    _
  $region23: #{inception_forward.1} parent=0 // pred_check_branch
    %29 = sbr.rel (0) target = $region25
  $region24: #{inception_forward.1} parent=0 // pred_region
    _
  $region25: #{inception_forward.1} parent=0 // pred_fallthru
    _
  // Predicated region
  $region26: #{inception_forward.1} parent=0 // pred_check
    _
  $region27: #{inception_forward.1} parent=0 // pred_check_branch
    %31 = sbr.rel (0) target = $region29
  $region28: #{inception_forward.1} parent=0 // pred_region
    _
  $region29: #{inception_forward.1} parent=0 // pred_fallthru
    _
  // Predicated region
  $region30: #{inception_forward.1} parent=0 // pred_check
    _
  $region31: #{inception_forward.1} parent=0 // pred_check_branch
    %33 = sbr.rel (0) target = $region33
  $region32: #{inception_forward.1} parent=0 // pred_region
    _
  $region33: #{inception_forward.1} parent=0 // pred_fallthru
    _
  // Predicated region
  $region34: #{inception_forward.1} parent=0 // pred_check
    _
  $region35: #{inception_forward.1} parent=0 // pred_check_branch
    %35 = sbr.rel (0) target = $region37
  $region36: #{inception_forward.1} parent=0 // pred_region
    _
  $region37: #{inception_forward.1} parent=0 // pred_fallthru
    _
  // Predicated region
  $region38: #{inception_forward.1} parent=0 // pred_check
    _
  $region39: #{inception_forward.1} parent=0 // pred_check_branch
    %37 = sbr.rel (0) target = $region41
  $region40: #{inception_forward.1} parent=0 // pred_region
    _
  $region41: #{inception_forward.1} parent=0 // pred_fallthru
    _
  // Predicated region
  $region42: #{inception_forward.1} parent=0 // pred_check
    _
  $region43: #{inception_forward.1} parent=0 // pred_check_branch
    %39 = sbr.rel (0) target = $region45
  $region44: #{inception_forward.1} parent=0 // pred_region
    _
  $region45: #{inception_forward.1} parent=0 // pred_fallthru
    _
  // Predicated region
  $region46: #{inception_forward.1} parent=0 // pred_check
    _
  $region47: #{inception_forward.1} parent=0 // pred_check_branch
    %41 = sbr.rel (0) target = $region49
  $region48: #{inception_forward.1} parent=0 // pred_region
    _
  $region49: #{inception_forward.1} parent=0 // pred_fallthru
    _
  // Predicated region
  $region50: #{inception_forward.1} parent=0 // pred_check
    _
  $region51: #{inception_forward.1} parent=0 // pred_check_branch
    %43 = sbr.rel (0) target = $region53
  $region52: #{inception_forward.1} parent=0 // pred_region
    _
  $region53: #{inception_forward.1} parent=0 // pred_fallthru
    _
  %v44 = vld [vmem:[%s0] sm:$0xff]
  %v45 = vld [vmem:[%s0 + $0x8] sm:$0xff]
  %v46 = vld [vmem:[%s0 + $0x10] sm:$0xff]
  %v47 = vld [vmem:[%s0 + $0x18] sm:$0xff]
  %v48 = vlaneseq
  %v49 = vand.u32 %v48, 127
  %v50 = vadd.s32 %v49, 128
  %v51 = vadd.s32 %v49, 256
  %v52 = vadd.s32 %v49, 384
  %v53 = vand.u32 %v49, 15
  %v54 = vand.u32 %v50, 15
  %v55 = vand.u32 %v51, 15
  %v56 = vand.u32 %v52, 15
  %v57 = vshra.s32 %v49, 4
  %v58 = vshra.s32 %v50, 4
  %v59 = vshra.s32 %v51, 4
  %v60 = vshra.s32 %v52, 4
  %v61 = vand.u32 %v57, 15
  %v62 = vand.u32 %v58, 15
  %v63 = vand.u32 %v59, 15
  %v64 = vand.u32 %v60, 15
  %vm65 = vcmp.ge.s32.totalorder %v61, 2
  %vm66 = vcmp.ge.s32.totalorder %v62, 2
  %vm67 = vcmp.ge.s32.totalorder %v63, 2
  %vm68 = vcmp.ge.s32.totalorder %v64, 2
  %vm69 = vcmp.ge.s32.totalorder %v61, 1
  %vm70 = vcmp.ge.s32.totalorder %v62, 1
  %vm71 = vcmp.ge.s32.totalorder %v63, 1
  %vm72 = vcmp.ge.s32.totalorder %v64, 1
  %vm73 = vcmp.lt.s32.totalorder %v61, 15
  %vm74 = vcmp.lt.s32.totalorder %v62, 15
  %vm75 = vcmp.lt.s32.totalorder %v63, 15
  %vm76 = vcmp.lt.s32.totalorder %v64, 15
  %vm77 = vcmp.lt.s32.totalorder %v61, 14
  %vm78 = vcmp.lt.s32.totalorder %v62, 14
  %vm79 = vcmp.lt.s32.totalorder %v63, 14
  %vm80 = vcmp.lt.s32.totalorder %v64, 14
  %vm81 = vcmp.ge.s32.totalorder %v53, 2
  %vm82 = vcmp.ge.s32.totalorder %v54, 2
  %vm83 = vcmp.ge.s32.totalorder %v55, 2
  %vm84 = vcmp.ge.s32.totalorder %v56, 2
  %vm85 = vcmp.ge.s32.totalorder %v53, 1
  %vm86 = vcmp.ge.s32.totalorder %v54, 1
  %vm87 = vcmp.ge.s32.totalorder %v55, 1
  %vm88 = vcmp.ge.s32.totalorder %v56, 1
  %vm89 = vcmp.lt.s32.totalorder %v53, 15
  %vm90 = vcmp.lt.s32.totalorder %v54, 15
  %vm91 = vcmp.lt.s32.totalorder %v55, 15
  %vm92 = vcmp.lt.s32.totalorder %v56, 15
  %vm93 = vcmp.lt.s32.totalorder %v53, 14
  %vm94 = vcmp.lt.s32.totalorder %v54, 14
  %vm95 = vcmp.lt.s32.totalorder %v55, 14
  %vm96 = vcmp.lt.s32.totalorder %v56, 14
  %v97 = vld [vmem:[%s1] sm:$0xff]
  %v98 = vld [vmem:[%s1 + $0x8] sm:$0xff]
  %v99 = vld [vmem:[%s1 + $0x10] sm:$0xff]
  %vm100 = vcmask 130048
  %v102 = vsel %vm100, %v97, 0
  %v105 = vsel %vm100, %v98, 0
  %v108 = vsel %vm100, %v99, 0
  %110 = vmatpush.msra.mxu0 0.0
  %111 = vmatpush.msra.mxu0 0.0
  %112 = vmatpush.msra.mxu0 0.0
  %113 = vmatpush.msra.mxu0 0.0
  %114 = vmatpush.msra.mxu0 0.0
  %115 = vmatpush.msra.mxu0 0.0
  %116 = vmatpush.msra.mxu0 0.0
  %117 = vmatpush.msra.mxu0 0.0
  %118 = vmatpush.msra.mxu0 0.0
  %119 = vmatpush.msra.mxu0 0.0
  %120 = vmatpush.msra.mxu0 0.0
  %121 = vmatpush.msra.mxu0 0.0
  %122 = vmatpush.msra.mxu0 0.0
  %123 = vmatpush.msra.mxu0 0.0
  %124 = vmatpush.msra.mxu0 1.0
  %125 = vmatpush.msra.mxu0 %v44
  %126 = vmatmul.f32.gmra.mxu0 %v102
  %v127 = vpop.f32.mrf.mxu0
  %v128 = vadd.f32 0.0, %v127
  %129 = vmatmul.f32.gmra.mxu0 %v105
  %v130 = vpop.f32.mrf.mxu0
  %v131 = vadd.f32 0.0, %v130
  %132 = vmatmul.f32.gmra.mxu0 %v108
  %v133 = vpop.f32.mrf.mxu0
  %v134 = vadd.f32 0.0, %v133
  %135 = vdwg.mxu0
  %136 = vmatpush.msra.mxu0 0.0
  %137 = vmatpush.msra.mxu0 0.0
  %138 = vmatpush.msra.mxu0 0.0
  %139 = vmatpush.msra.mxu0 0.0
  %140 = vmatpush.msra.mxu0 0.0
  %141 = vmatpush.msra.mxu0 0.0
  %142 = vmatpush.msra.mxu0 0.0
  %143 = vmatpush.msra.mxu0 0.0
  %144 = vmatpush.msra.mxu0 0.0
  %145 = vmatpush.msra.mxu0 0.0
  %146 = vmatpush.msra.mxu0 0.0
  %147 = vmatpush.msra.mxu0 0.0
  %148 = vmatpush.msra.mxu0 0.0
  %149 = vmatpush.msra.mxu0 0.0
  %150 = vmatpush.msra.mxu0 1.0
  %151 = vmatpush.msra.mxu0 %v45
  %152 = vmatmul.f32.gmra.mxu0 %v102
  %v153 = vpop.f32.mrf.mxu0
  %v154 = vadd.f32 0.0, %v153
  %155 = vmatmul.f32.gmra.mxu0 %v105
  %v156 = vpop.f32.mrf.mxu0
  %v157 = vadd.f32 0.0, %v156
  %158 = vmatmul.f32.gmra.mxu0 %v108
  %v159 = vpop.f32.mrf.mxu0
  %v160 = vadd.f32 0.0, %v159
  %161 = vdwg.mxu0
  %162 = vmatpush.msra.mxu0 0.0
  %163 = vmatpush.msra.mxu0 0.0
  %164 = vmatpush.msra.mxu0 0.0
  %165 = vmatpush.msra.mxu0 0.0
  %166 = vmatpush.msra.mxu0 0.0
  %167 = vmatpush.msra.mxu0 0.0
  %168 = vmatpush.msra.mxu0 0.0
  %169 = vmatpush.msra.mxu0 0.0
  %170 = vmatpush.msra.mxu0 0.0
  %171 = vmatpush.msra.mxu0 0.0
  %172 = vmatpush.msra.mxu0 0.0
  %173 = vmatpush.msra.mxu0 0.0
  %174 = vmatpush.msra.mxu0 0.0
  %175 = vmatpush.msra.mxu0 0.0
  %176 = vmatpush.msra.mxu0 1.0
  %177 = vmatpush.msra.mxu0 %v46
  %178 = vmatmul.f32.gmra.mxu0 %v102
  %v179 = vpop.f32.mrf.mxu0
  %v180 = vadd.f32 0.0, %v179
  %181 = vmatmul.f32.gmra.mxu0 %v105
  %v182 = vpop.f32.mrf.mxu0
  %v183 = vadd.f32 0.0, %v182
  %184 = vmatmul.f32.gmra.mxu0 %v108
  %v185 = vpop.f32.mrf.mxu0
  %v186 = vadd.f32 0.0, %v185
  %187 = vdwg.mxu0
  %188 = vmatpush.msra.mxu0 0.0
  %189 = vmatpush.msra.mxu0 0.0
  %190 = vmatpush.msra.mxu0 0.0
  %191 = vmatpush.msra.mxu0 0.0
  %192 = vmatpush.msra.mxu0 0.0
  %193 = vmatpush.msra.mxu0 0.0
  %194 = vmatpush.msra.mxu0 0.0
  %195 = vmatpush.msra.mxu0 0.0
  %196 = vmatpush.msra.mxu0 0.0
  %197 = vmatpush.msra.mxu0 0.0
  %198 = vmatpush.msra.mxu0 0.0
  %199 = vmatpush.msra.mxu0 0.0
  %200 = vmatpush.msra.mxu0 0.0
  %201 = vmatpush.msra.mxu0 0.0
  %202 = vmatpush.msra.mxu0 1.0
  %203 = vmatpush.msra.mxu0 %v47
  %204 = vmatmul.f32.gmra.mxu0 %v102
  %v205 = vpop.f32.mrf.mxu0
  %v206 = vadd.f32 0.0, %v205
  %207 = vmatmul.f32.gmra.mxu0 %v105
  %v208 = vpop.f32.mrf.mxu0
  %v209 = vadd.f32 0.0, %v208
  %210 = vmatmul.f32.gmra.mxu0 %v108
  %v211 = vpop.f32.mrf.mxu0
  %v212 = vadd.f32 0.0, %v211
  %213 = vdwg.mxu0
  %v214 = vld [vmem:[%s2] sm:$0xff]
  %v215 = vld [vmem:[%s2 + $0x8] sm:$0xff]
  %v216 = vld [vmem:[%s2 + $0x10] sm:$0xff]
  %v217 = vld [vmem:[%s3] sm:$0xff]
  %v218 = vld [vmem:[%s3 + $0x8] sm:$0xff]
  %v219 = vld [vmem:[%s3 + $0x10] sm:$0xff]
  %v220 = vmax.f32 %v128, 0.0
  %v221 = vmax.f32 %v154, 0.0
  %v222 = vmax.f32 %v180, 0.0
  %v223 = vmax.f32 %v206, 0.0
  %v224 = vmax.f32 %v131, 0.0
  %v225 = vmax.f32 %v157, 0.0
  %v226 = vmax.f32 %v183, 0.0
  %v227 = vmax.f32 %v209, 0.0
  %v228 = vmax.f32 %v134, 0.0
  %v229 = vmax.f32 %v160, 0.0
  %v230 = vmax.f32 %v186, 0.0
  %v231 = vmax.f32 %v212, 0.0
  %v232 = vadd.f32 %v220, %v221
  %v233 = vadd.f32 %v232, %v222
  %v234 = vadd.f32 %v233, %v223
  %235 = vadd.xlane.f32.xlu0 %v234
  %v236 = vpop.xlane.xlu0 %235
  %v237 = vadd.f32 %v224, %v225
  %v238 = vadd.f32 %v237, %v226
  %v239 = vadd.f32 %v238, %v227
  %240 = vadd.xlane.f32.xlu0 %v239
  %v241 = vpop.xlane.xlu0 %240
  %v242 = vadd.f32 %v228, %v229
  %v243 = vadd.f32 %v242, %v230
  %v244 = vadd.f32 %v243, %v231
  %245 = vadd.xlane.f32.xlu0 %v244
  %v246 = vpop.xlane.xlu0 %245
  %v247 = vrcp.pop 512.0
  %v248 = vmul.f32 512.0, %v247
  %v249 = vsub.f32 1.0, %v248
  %v250 = vmul.f32 %v247, %v249
  %v251 = vadd.f32 %v247, %v250
  %vm252 = vweird.f32 %v247
  %v253 = vsel %vm252, %v247, %v251
  %v254 = vmul.f32 %v236, %v253
  %v255 = vmul.f32 %v241, %v253
  %v256 = vmul.f32 %v246, %v253
  %v257 = vsub.f32 %v220, %v254
  %v258 = vsub.f32 %v221, %v254
  %v259 = vsub.f32 %v222, %v254
  %v260 = vsub.f32 %v223, %v254
  %v261 = vsub.f32 %v224, %v255
  %v262 = vsub.f32 %v225, %v255
  %v263 = vsub.f32 %v226, %v255
  %v264 = vsub.f32 %v227, %v255
  %v265 = vsub.f32 %v228, %v256
  %v266 = vsub.f32 %v229, %v256
  %v267 = vsub.f32 %v230, %v256
  %v268 = vsub.f32 %v231, %v256
  %v269 = vmul.f32 %v257, %v257
  %v270 = vmul.f32 %v258, %v258
  %v271 = vmul.f32 %v259, %v259
  %v272 = vmul.f32 %v260, %v260
  %v273 = vmul.f32 %v261, %v261
  %v274 = vmul.f32 %v262, %v262
  %v275 = vmul.f32 %v263, %v263
  %v276 = vmul.f32 %v264, %v264
  %v277 = vmul.f32 %v265, %v265
  %v278 = vmul.f32 %v266, %v266
  %v279 = vmul.f32 %v267, %v267
  %v280 = vmul.f32 %v268, %v268
  %v281 = vadd.f32 %v269, %v270
  %v282 = vadd.f32 %v281, %v271
  %v283 = vadd.f32 %v282, %v272
  %284 = vadd.xlane.f32.xlu0 %v283
  %v285 = vpop.xlane.xlu0 %284
  %v286 = vadd.f32 %v273, %v274
  %v287 = vadd.f32 %v286, %v275
  %v288 = vadd.f32 %v287, %v276
  %289 = vadd.xlane.f32.xlu0 %v288
  %v290 = vpop.xlane.xlu0 %289
  %v291 = vadd.f32 %v277, %v278
  %v292 = vadd.f32 %v291, %v279
  %v293 = vadd.f32 %v292, %v280
  %294 = vadd.xlane.f32.xlu0 %v293
  %v295 = vpop.xlane.xlu0 %294
  %v296 = vmul.f32 %v285, %v253
  %v297 = vmul.f32 %v290, %v253
  %v298 = vmul.f32 %v295, %v253
  %300 = vset.pattern.permute.xlu0 0
  %301 = vperm.xlu0 %300, %v214
  %v302 = vpop.permute.xlu0 %301
  %305 = vset.pattern.permute.xlu0 0
  %306 = vperm.xlu0 %305, %v215
  %v307 = vpop.permute.xlu0 %306
  %310 = vset.pattern.permute.xlu0 0
  %311 = vperm.xlu0 %310, %v216
  %v312 = vpop.permute.xlu0 %311
  %v314 = vmul.f32 %v302, %v257
  %v315 = vmul.f32 %v302, %v258
  %v316 = vmul.f32 %v302, %v259
  %v317 = vmul.f32 %v302, %v260
  %v318 = vmul.f32 %v307, %v261
  %v319 = vmul.f32 %v307, %v262
  %v320 = vmul.f32 %v307, %v263
  %v321 = vmul.f32 %v307, %v264
  %v322 = vmul.f32 %v312, %v265
  %v323 = vmul.f32 %v312, %v266
  %v324 = vmul.f32 %v312, %v267
  %v325 = vmul.f32 %v312, %v268
  %v326 = vadd.f32 %v296, 1e-05
  %v327 = vadd.f32 %v297, 1e-05
  %v328 = vadd.f32 %v298, 1e-05
  %v329 = vrsqrt.pop %v326
  %v330 = vmul.f32 %v329, %v326
  %v331 = vmul.f32 %v330, %v329
  %v332 = vmul.f32 0.5, %v331
  %v333 = vsub.f32 1.5, %v332
  %v334 = vmul.f32 %v329, %v333
  %vm335 = vweird.f32 %v326
  %vm336 = vweird.f32 %v329
  %vm337 = vmor %vm335, %vm336
  %v338 = vsel %vm337, %v329, %v334
  %v339 = vrsqrt.pop %v327
  %v340 = vmul.f32 %v339, %v327
  %v341 = vmul.f32 %v340, %v339
  %v342 = vmul.f32 0.5, %v341
  %v343 = vsub.f32 1.5, %v342
  %v344 = vmul.f32 %v339, %v343
  %vm345 = vweird.f32 %v327
  %vm346 = vweird.f32 %v339
  %vm347 = vmor %vm345, %vm346
  %v348 = vsel %vm347, %v339, %v344
  %v349 = vrsqrt.pop %v328
  %v350 = vmul.f32 %v349, %v328
  %v351 = vmul.f32 %v350, %v349
  %v352 = vmul.f32 0.5, %v351
  %v353 = vsub.f32 1.5, %v352
  %v354 = vmul.f32 %v349, %v353
  %vm355 = vweird.f32 %v328
  %vm356 = vweird.f32 %v349
  %vm357 = vmor %vm355, %vm356
  %v358 = vsel %vm357, %v349, %v354
  %v359 = vmul.f32 %v314, %v338
  %v360 = vmul.f32 %v315, %v338
  %v361 = vmul.f32 %v316, %v338
  %v362 = vmul.f32 %v317, %v338
  %v363 = vmul.f32 %v318, %v348
  %v364 = vmul.f32 %v319, %v348
  %v365 = vmul.f32 %v320, %v348
  %v366 = vmul.f32 %v321, %v348
  %v367 = vmul.f32 %v322, %v358
  %v368 = vmul.f32 %v323, %v358
  %v369 = vmul.f32 %v324, %v358
  %v370 = vmul.f32 %v325, %v358
  %372 = vset.pattern.permute.xlu0 0
  %373 = vperm.xlu0 %372, %v217
  %v374 = vpop.permute.xlu0 %373
  %377 = vset.pattern.permute.xlu0 0
  %378 = vperm.xlu0 %377, %v218
  %v379 = vpop.permute.xlu0 %378
  %382 = vset.pattern.permute.xlu0 0
  %383 = vperm.xlu0 %382, %v219
  %v384 = vpop.permute.xlu0 %383
  %v386 = vadd.f32 %v359, %v374
  %v387 = vadd.f32 %v360, %v374
  %v388 = vadd.f32 %v361, %v374
  %v389 = vadd.f32 %v362, %v374
  %v390 = vadd.f32 %v363, %v379
  %v391 = vadd.f32 %v364, %v379
  %v392 = vadd.f32 %v365, %v379
  %v393 = vadd.f32 %v366, %v379
  %v394 = vadd.f32 %v367, %v384
  %v395 = vadd.f32 %v368, %v384
  %v396 = vadd.f32 %v369, %v384
  %v397 = vadd.f32 %v370, %v384
  %398 = vrot.lane.b32.xlu0 %v390, 17
  %v399 = vpop.permute.xlu0 %398
  %400 = vrot.lane.b32.xlu0 %v391, 17
  %v401 = vpop.permute.xlu0 %400
  %402 = vrot.lane.b32.xlu0 %v392, 17
  %v403 = vpop.permute.xlu0 %402
  %404 = vrot.lane.b32.xlu0 %v393, 17
  %v405 = vpop.permute.xlu0 %404
  %vm406 = vcmp.lt.s32.totalorder %v49, 17
  %v407 = vsel %vm406, %v403, %v405
  %v408 = vsel %vm406, %v401, %v403
  %v409 = vsel %vm406, %v399, %v401
  %v410 = vsel %vm406, %v405, %v399
  %vm411 = vmand %vm69, %vm85
  %vm412 = vmand %vm70, %vm86
  %vm413 = vmand %vm71, %vm87
  %vm414 = vmand %vm72, %vm88
  %v415 = vsel %vm411, 1, 0
  %v416 = vsel %vm412, 1, 0
  %v417 = vsel %vm413, 1, 0
  %v418 = vsel %vm414, 1, 0
  %vm419 = vcmp.eq.s32.totalorder %v415, 1
  %vm420 = vcmp.eq.s32.totalorder %v416, 1
  %vm421 = vcmp.eq.s32.totalorder %v417, 1
  %vm422 = vcmp.eq.s32.totalorder %v418, 1
  %v423 = vsel %vm419, %v410, 0.0
  %v424 = vsel %vm420, %v409, 0.0
  %v425 = vsel %vm421, %v408, 0.0
  %v426 = vsel %vm422, %v407, 0.0
  %427 = vrot.lane.b32.xlu0 %v390, 16
  %v428 = vpop.permute.xlu0 %427
  %429 = vrot.lane.b32.xlu0 %v391, 16
  %v430 = vpop.permute.xlu0 %429
  %431 = vrot.lane.b32.xlu0 %v392, 16
  %v432 = vpop.permute.xlu0 %431
  %433 = vrot.lane.b32.xlu0 %v393, 16
  %v434 = vpop.permute.xlu0 %433
  %vm435 = vcmp.lt.s32.totalorder %v49, 16
  %v436 = vsel %vm435, %v432, %v434
  %v437 = vsel %vm435, %v430, %v432
  %v438 = vsel %vm435, %v428, %v430
  %v439 = vsel %vm435, %v434, %v428
  %v440 = vsel %vm69, 1, 0
  %v441 = vsel %vm70, 1, 0
  %v442 = vsel %vm71, 1, 0
  %v443 = vsel %vm72, 1, 0
  %vm444 = vcmp.eq.s32.totalorder %v440, 1
  %vm445 = vcmp.eq.s32.totalorder %v441, 1
  %vm446 = vcmp.eq.s32.totalorder %v442, 1
  %vm447 = vcmp.eq.s32.totalorder %v443, 1
  %v448 = vsel %vm444, %v439, 0.0
  %v449 = vsel %vm445, %v438, 0.0
  %v450 = vsel %vm446, %v437, 0.0
  %v451 = vsel %vm447, %v436, 0.0
  %452 = vrot.lane.b32.xlu0 %v390, 15
  %v453 = vpop.permute.xlu0 %452
  %454 = vrot.lane.b32.xlu0 %v391, 15
  %v455 = vpop.permute.xlu0 %454
  %456 = vrot.lane.b32.xlu0 %v392, 15
  %v457 = vpop.permute.xlu0 %456
  %458 = vrot.lane.b32.xlu0 %v393, 15
  %v459 = vpop.permute.xlu0 %458
  %vm460 = vcmp.lt.s32.totalorder %v49, 15
  %v461 = vsel %vm460, %v457, %v459
  %v462 = vsel %vm460, %v455, %v457
  %v463 = vsel %vm460, %v453, %v455
  %v464 = vsel %vm460, %v459, %v453
  %vm465 = vmand %vm69, %vm89
  %vm466 = vmand %vm70, %vm90
  %vm467 = vmand %vm71, %vm91
  %vm468 = vmand %vm72, %vm92
  %v469 = vsel %vm465, 1, 0
  %v470 = vsel %vm466, 1, 0
  %v471 = vsel %vm467, 1, 0
  %v472 = vsel %vm468, 1, 0
  %vm473 = vcmp.eq.s32.totalorder %v469, 1
  %vm474 = vcmp.eq.s32.totalorder %v470, 1
  %vm475 = vcmp.eq.s32.totalorder %v471, 1
  %vm476 = vcmp.eq.s32.totalorder %v472, 1
  %v477 = vsel %vm473, %v464, 0.0
  %v478 = vsel %vm474, %v463, 0.0
  %v479 = vsel %vm475, %v462, 0.0
  %v480 = vsel %vm476, %v461, 0.0
  %481 = vrot.lane.b32.xlu0 %v390, 1
  %v482 = vpop.permute.xlu0 %481
  %483 = vrot.lane.b32.xlu0 %v391, 1
  %v484 = vpop.permute.xlu0 %483
  %485 = vrot.lane.b32.xlu0 %v392, 1
  %v486 = vpop.permute.xlu0 %485
  %487 = vrot.lane.b32.xlu0 %v393, 1
  %v488 = vpop.permute.xlu0 %487
  %vm489 = vcmp.lt.s32.totalorder %v49, 1
  %v490 = vsel %vm489, %v486, %v488
  %v491 = vsel %vm489, %v484, %v486
  %v492 = vsel %vm489, %v482, %v484
  %v493 = vsel %vm489, %v488, %v482
  %v494 = vsel %vm85, 1, 0
  %v495 = vsel %vm86, 1, 0
  %v496 = vsel %vm87, 1, 0
  %v497 = vsel %vm88, 1, 0
  %vm498 = vcmp.eq.s32.totalorder %v494, 1
  %vm499 = vcmp.eq.s32.totalorder %v495, 1
  %vm500 = vcmp.eq.s32.totalorder %v496, 1
  %vm501 = vcmp.eq.s32.totalorder %v497, 1
  %v502 = vsel %vm498, %v493, 0.0
  %v503 = vsel %vm499, %v492, 0.0
  %v504 = vsel %vm500, %v491, 0.0
  %v505 = vsel %vm501, %v490, 0.0
  %506 = vrot.lane.b32.xlu0 %v390, 127
  %v507 = vpop.permute.xlu0 %506
  %508 = vrot.lane.b32.xlu0 %v391, 127
  %v509 = vpop.permute.xlu0 %508
  %510 = vrot.lane.b32.xlu0 %v392, 127
  %v511 = vpop.permute.xlu0 %510
  %512 = vrot.lane.b32.xlu0 %v393, 127
  %v513 = vpop.permute.xlu0 %512
  %vm514 = vcmp.lt.s32.totalorder %v49, 127
  %v515 = vsel %vm514, %v511, %v513
  %v516 = vsel %vm514, %v509, %v511
  %v517 = vsel %vm514, %v507, %v509
  %v518 = vsel %vm514, %v513, %v507
  %v519 = vsel %vm89, 1, 0
  %v520 = vsel %vm90, 1, 0
  %v521 = vsel %vm91, 1, 0
  %v522 = vsel %vm92, 1, 0
  %vm523 = vcmp.eq.s32.totalorder %v519, 1
  %vm524 = vcmp.eq.s32.totalorder %v520, 1
  %vm525 = vcmp.eq.s32.totalorder %v521, 1
  %vm526 = vcmp.eq.s32.totalorder %v522, 1
  %v527 = vsel %vm523, %v517, 0.0
  %v528 = vsel %vm524, %v516, 0.0
  %v529 = vsel %vm525, %v515, 0.0
  %v530 = vsel %vm526, %v518, 0.0
  %531 = vrot.lane.b32.xlu0 %v390, 113
  %v532 = vpop.permute.xlu0 %531
  %533 = vrot.lane.b32.xlu0 %v391, 113
  %v534 = vpop.permute.xlu0 %533
  %535 = vrot.lane.b32.xlu0 %v392, 113
  %v536 = vpop.permute.xlu0 %535
  %537 = vrot.lane.b32.xlu0 %v393, 113
  %v538 = vpop.permute.xlu0 %537
  %vm539 = vcmp.lt.s32.totalorder %v49, 113
  %v540 = vsel %vm539, %v536, %v538
  %v541 = vsel %vm539, %v534, %v536
  %v542 = vsel %vm539, %v532, %v534
  %v543 = vsel %vm539, %v538, %v532
  %vm544 = vmand %vm73, %vm85
  %vm545 = vmand %vm74, %vm86
  %vm546 = vmand %vm75, %vm87
  %vm547 = vmand %vm76, %vm88
  %v548 = vsel %vm544, 1, 0
  %v549 = vsel %vm545, 1, 0
  %v550 = vsel %vm546, 1, 0
  %v551 = vsel %vm547, 1, 0
  %vm552 = vcmp.eq.s32.totalorder %v548, 1
  %vm553 = vcmp.eq.s32.totalorder %v549, 1
  %vm554 = vcmp.eq.s32.totalorder %v550, 1
  %vm555 = vcmp.eq.s32.totalorder %v551, 1
  %v556 = vsel %vm552, %v542, 0.0
  %v557 = vsel %vm553, %v541, 0.0
  %v558 = vsel %vm554, %v540, 0.0
  %v559 = vsel %vm555, %v543, 0.0
  %560 = vrot.lane.b32.xlu0 %v390, 112
  %v561 = vpop.permute.xlu0 %560
  %562 = vrot.lane.b32.xlu0 %v391, 112
  %v563 = vpop.permute.xlu0 %562
  %564 = vrot.lane.b32.xlu0 %v392, 112
  %v565 = vpop.permute.xlu0 %564
  %566 = vrot.lane.b32.xlu0 %v393, 112
  %v567 = vpop.permute.xlu0 %566
  %vm568 = vcmp.lt.s32.totalorder %v49, 112
  %v569 = vsel %vm568, %v565, %v567
  %v570 = vsel %vm568, %v563, %v565
  %v571 = vsel %vm568, %v561, %v563
  %v572 = vsel %vm568, %v567, %v561
  %v573 = vsel %vm73, 1, 0
  %v574 = vsel %vm74, 1, 0
  %v575 = vsel %vm75, 1, 0
  %v576 = vsel %vm76, 1, 0
  %vm577 = vcmp.eq.s32.totalorder %v573, 1
  %vm578 = vcmp.eq.s32.totalorder %v574, 1
  %vm579 = vcmp.eq.s32.totalorder %v575, 1
  %vm580 = vcmp.eq.s32.totalorder %v576, 1
  %v581 = vsel %vm577, %v571, 0.0
  %v582 = vsel %vm578, %v570, 0.0
  %v583 = vsel %vm579, %v569, 0.0
  %v584 = vsel %vm580, %v572, 0.0
  %585 = vrot.lane.b32.xlu0 %v390, 111
  %v586 = vpop.permute.xlu0 %585
  %587 = vrot.lane.b32.xlu0 %v391, 111
  %v588 = vpop.permute.xlu0 %587
  %589 = vrot.lane.b32.xlu0 %v392, 111
  %v590 = vpop.permute.xlu0 %589
  %591 = vrot.lane.b32.xlu0 %v393, 111
  %v592 = vpop.permute.xlu0 %591
  %vm593 = vcmp.lt.s32.totalorder %v49, 111
  %v594 = vsel %vm593, %v590, %v592
  %v595 = vsel %vm593, %v588, %v590
  %v596 = vsel %vm593, %v586, %v588
  %v597 = vsel %vm593, %v592, %v586
  %vm598 = vmand %vm73, %vm89
  %vm599 = vmand %vm74, %vm90
  %vm600 = vmand %vm75, %vm91
  %vm601 = vmand %vm76, %vm92
  %v602 = vsel %vm598, 1, 0
  %v603 = vsel %vm599, 1, 0
  %v604 = vsel %vm600, 1, 0
  %v605 = vsel %vm601, 1, 0
  %vm606 = vcmp.eq.s32.totalorder %v602, 1
  %vm607 = vcmp.eq.s32.totalorder %v603, 1
  %vm608 = vcmp.eq.s32.totalorder %v604, 1
  %vm609 = vcmp.eq.s32.totalorder %v605, 1
  %v610 = vsel %vm606, %v596, 0.0
  %v611 = vsel %vm607, %v595, 0.0
  %v612 = vsel %vm608, %v594, 0.0
  %v613 = vsel %vm609, %v597, 0.0
  %v614 = vld [vmem:[%s4] sm:$0xff]
  %v615 = vld [vmem:[%s4 + $0x8] sm:$0xff]
  %vm616 = vcmask 654336
  %v618 = vsel %vm616, %v614, 0
  %v621 = vsel %vm616, %v615, 0
  %623 = vmatpush.msra.mxu0 0.0
  %624 = vmatpush.msra.mxu0 0.0
  %625 = vmatpush.msra.mxu0 0.0
  %626 = vmatpush.msra.mxu0 0.0
  %627 = vmatpush.msra.mxu0 0.0
  %628 = vmatpush.msra.mxu0 0.0
  %629 = vmatpush.msra.mxu0 1.0
  %630 = vmatpush.msra.mxu0 %v610
  %631 = vmatpush.msra.mxu0 %v581
  %632 = vmatpush.msra.mxu0 %v556
  %633 = vmatpush.msra.mxu0 %v527
  %634 = vmatpush.msra.mxu0 %v390
  %635 = vmatpush.msra.mxu0 %v502
  %636 = vmatpush.msra.mxu0 %v477
  %637 = vmatpush.msra.mxu0 %v448
  %638 = vmatpush.msra.mxu0 %v423
  %639 = vmatmul.f32.gmra.mxu0 %v618
  %v640 = vpop.f32.mrf.mxu0
  %v641 = vadd.f32 0.0, %v640
  %642 = vmatmul.f32.gmra.mxu0 %v621
  %v643 = vpop.f32.mrf.mxu0
  %v644 = vadd.f32 0.0, %v643
  %645 = vdwg.mxu0
  %646 = vmatpush.msra.mxu0 0.0
  %647 = vmatpush.msra.mxu0 0.0
  %648 = vmatpush.msra.mxu0 0.0
  %649 = vmatpush.msra.mxu0 0.0
  %650 = vmatpush.msra.mxu0 0.0
  %651 = vmatpush.msra.mxu0 0.0
  %652 = vmatpush.msra.mxu0 1.0
  %653 = vmatpush.msra.mxu0 %v611
  %654 = vmatpush.msra.mxu0 %v582
  %655 = vmatpush.msra.mxu0 %v557
  %656 = vmatpush.msra.mxu0 %v528
  %657 = vmatpush.msra.mxu0 %v391
  %658 = vmatpush.msra.mxu0 %v503
  %659 = vmatpush.msra.mxu0 %v478
  %660 = vmatpush.msra.mxu0 %v449
  %661 = vmatpush.msra.mxu0 %v424
  %662 = vmatmul.f32.gmra.mxu0 %v618
  %v663 = vpop.f32.mrf.mxu0
  %v664 = vadd.f32 0.0, %v663
  %665 = vmatmul.f32.gmra.mxu0 %v621
  %v666 = vpop.f32.mrf.mxu0
  %v667 = vadd.f32 0.0, %v666
  %668 = vdwg.mxu0
  %669 = vmatpush.msra.mxu0 0.0
  %670 = vmatpush.msra.mxu0 0.0
  %671 = vmatpush.msra.mxu0 0.0
  %672 = vmatpush.msra.mxu0 0.0
  %673 = vmatpush.msra.mxu0 0.0
  %674 = vmatpush.msra.mxu0 0.0
  %675 = vmatpush.msra.mxu0 1.0
  %676 = vmatpush.msra.mxu0 %v612
  %677 = vmatpush.msra.mxu0 %v583
  %678 = vmatpush.msra.mxu0 %v558
  %679 = vmatpush.msra.mxu0 %v529
  %680 = vmatpush.msra.mxu0 %v392
  %681 = vmatpush.msra.mxu0 %v504
  %682 = vmatpush.msra.mxu0 %v479
  %683 = vmatpush.msra.mxu0 %v450
  %684 = vmatpush.msra.mxu0 %v425
  %685 = vmatmul.f32.gmra.mxu0 %v618
  %v686 = vpop.f32.mrf.mxu0
  %v687 = vadd.f32 0.0, %v686
  %688 = vmatmul.f32.gmra.mxu0 %v621
  %v689 = vpop.f32.mrf.mxu0
  %v690 = vadd.f32 0.0, %v689
  %691 = vdwg.mxu0
  %692 = vmatpush.msra.mxu0 0.0
  %693 = vmatpush.msra.mxu0 0.0
  %694 = vmatpush.msra.mxu0 0.0
  %695 = vmatpush.msra.mxu0 0.0
  %696 = vmatpush.msra.mxu0 0.0
  %697 = vmatpush.msra.mxu0 0.0
  %698 = vmatpush.msra.mxu0 1.0
  %699 = vmatpush.msra.mxu0 %v613
  %700 = vmatpush.msra.mxu0 %v584
  %701 = vmatpush.msra.mxu0 %v559
  %702 = vmatpush.msra.mxu0 %v530
  %703 = vmatpush.msra.mxu0 %v393
  %704 = vmatpush.msra.mxu0 %v505
  %705 = vmatpush.msra.mxu0 %v480
  %706 = vmatpush.msra.mxu0 %v451
  %707 = vmatpush.msra.mxu0 %v426
  %708 = vmatmul.f32.gmra.mxu0 %v618
  %v709 = vpop.f32.mrf.mxu0
  %v710 = vadd.f32 0.0, %v709
  %711 = vmatmul.f32.gmra.mxu0 %v621
  %v712 = vpop.f32.mrf.mxu0
  %v713 = vadd.f32 0.0, %v712
  %714 = vdwg.mxu0
  %v715 = vld [vmem:[%s5] sm:$0xff]
  %v716 = vld [vmem:[%s5 + $0x8] sm:$0xff]
  %v717 = vld [vmem:[%s6] sm:$0xff]
  %v718 = vld [vmem:[%s6 + $0x8] sm:$0xff]
  %v719 = vmax.f32 %v641, 0.0
  %v720 = vmax.f32 %v664, 0.0
  %v721 = vmax.f32 %v687, 0.0
  %v722 = vmax.f32 %v710, 0.0
  %v723 = vmax.f32 %v644, 0.0
  %v724 = vmax.f32 %v667, 0.0
  %v725 = vmax.f32 %v690, 0.0
  %v726 = vmax.f32 %v713, 0.0
  %v727 = vadd.f32 %v719, %v720
  %v728 = vadd.f32 %v727, %v721
  %v729 = vadd.f32 %v728, %v722
  %730 = vadd.xlane.f32.xlu0 %v729
  %v731 = vpop.xlane.xlu0 %730
  %v732 = vadd.f32 %v723, %v724
  %v733 = vadd.f32 %v732, %v725
  %v734 = vadd.f32 %v733, %v726
  %735 = vadd.xlane.f32.xlu0 %v734
  %v736 = vpop.xlane.xlu0 %735
  %v737 = vmul.f32 %v731, %v253
  %v738 = vmul.f32 %v736, %v253
  %v739 = vsub.f32 %v719, %v737
  %v740 = vsub.f32 %v720, %v737
  %v741 = vsub.f32 %v721, %v737
  %v742 = vsub.f32 %v722, %v737
  %v743 = vsub.f32 %v723, %v738
  %v744 = vsub.f32 %v724, %v738
  %v745 = vsub.f32 %v725, %v738
  %v746 = vsub.f32 %v726, %v738
  %v747 = vmul.f32 %v739, %v739
  %v748 = vmul.f32 %v740, %v740
  %v749 = vmul.f32 %v741, %v741
  %v750 = vmul.f32 %v742, %v742
  %v751 = vmul.f32 %v743, %v743
  %v752 = vmul.f32 %v744, %v744
  %v753 = vmul.f32 %v745, %v745
  %v754 = vmul.f32 %v746, %v746
  %v755 = vadd.f32 %v747, %v748
  %v756 = vadd.f32 %v755, %v749
  %v757 = vadd.f32 %v756, %v750
  %758 = vadd.xlane.f32.xlu0 %v757
  %v759 = vpop.xlane.xlu0 %758
  %v760 = vadd.f32 %v751, %v752
  %v761 = vadd.f32 %v760, %v753
  %v762 = vadd.f32 %v761, %v754
  %763 = vadd.xlane.f32.xlu0 %v762
  %v764 = vpop.xlane.xlu0 %763
  %v765 = vmul.f32 %v759, %v253
  %v766 = vmul.f32 %v764, %v253
  %768 = vset.pattern.permute.xlu0 0
  %769 = vperm.xlu0 %768, %v715
  %v770 = vpop.permute.xlu0 %769
  %773 = vset.pattern.permute.xlu0 0
  %774 = vperm.xlu0 %773, %v716
  %v775 = vpop.permute.xlu0 %774
  %v777 = vmul.f32 %v770, %v739
  %v778 = vmul.f32 %v770, %v740
  %v779 = vmul.f32 %v770, %v741
  %v780 = vmul.f32 %v770, %v742
  %v781 = vmul.f32 %v775, %v743
  %v782 = vmul.f32 %v775, %v744
  %v783 = vmul.f32 %v775, %v745
  %v784 = vmul.f32 %v775, %v746
  %v785 = vadd.f32 %v765, 1e-05
  %v786 = vadd.f32 %v766, 1e-05
  %v787 = vrsqrt.pop %v785
  %v788 = vmul.f32 %v787, %v785
  %v789 = vmul.f32 %v788, %v787
  %v790 = vmul.f32 0.5, %v789
  %v791 = vsub.f32 1.5, %v790
  %v792 = vmul.f32 %v787, %v791
  %vm793 = vweird.f32 %v785
  %vm794 = vweird.f32 %v787
  %vm795 = vmor %vm793, %vm794
  %v796 = vsel %vm795, %v787, %v792
  %v797 = vrsqrt.pop %v786
  %v798 = vmul.f32 %v797, %v786
  %v799 = vmul.f32 %v798, %v797
  %v800 = vmul.f32 0.5, %v799
  %v801 = vsub.f32 1.5, %v800
  %v802 = vmul.f32 %v797, %v801
  %vm803 = vweird.f32 %v786
  %vm804 = vweird.f32 %v797
  %vm805 = vmor %vm803, %vm804
  %v806 = vsel %vm805, %v797, %v802
  %v807 = vmul.f32 %v777, %v796
  %v808 = vmul.f32 %v778, %v796
  %v809 = vmul.f32 %v779, %v796
  %v810 = vmul.f32 %v780, %v796
  %v811 = vmul.f32 %v781, %v806
  %v812 = vmul.f32 %v782, %v806
  %v813 = vmul.f32 %v783, %v806
  %v814 = vmul.f32 %v784, %v806
  %816 = vset.pattern.permute.xlu0 0
  %817 = vperm.xlu0 %816, %v717
  %v818 = vpop.permute.xlu0 %817
  %821 = vset.pattern.permute.xlu0 0
  %822 = vperm.xlu0 %821, %v718
  %v823 = vpop.permute.xlu0 %822
  %v825 = vadd.f32 %v807, %v818
  %v826 = vadd.f32 %v808, %v818
  %v827 = vadd.f32 %v809, %v818
  %v828 = vadd.f32 %v810, %v818
  %v829 = vadd.f32 %v811, %v823
  %v830 = vadd.f32 %v812, %v823
  %v831 = vadd.f32 %v813, %v823
  %v832 = vadd.f32 %v814, %v823
  %833 = vrot.lane.b32.xlu0 %v394, 34
  %v834 = vpop.permute.xlu0 %833
  %835 = vrot.lane.b32.xlu0 %v395, 34
  %v836 = vpop.permute.xlu0 %835
  %837 = vrot.lane.b32.xlu0 %v396, 34
  %v838 = vpop.permute.xlu0 %837
  %839 = vrot.lane.b32.xlu0 %v397, 34
  %v840 = vpop.permute.xlu0 %839
  %vm841 = vcmp.lt.s32.totalorder %v49, 34
  %v842 = vsel %vm841, %v838, %v840
  %v843 = vsel %vm841, %v836, %v838
  %v844 = vsel %vm841, %v834, %v836
  %v845 = vsel %vm841, %v840, %v834
  %vm846 = vmand %vm65, %vm81
  %vm847 = vmand %vm66, %vm82
  %vm848 = vmand %vm67, %vm83
  %vm849 = vmand %vm68, %vm84
  %v850 = vsel %vm846, 1, 0
  %v851 = vsel %vm847, 1, 0
  %v852 = vsel %vm848, 1, 0
  %v853 = vsel %vm849, 1, 0
  %vm854 = vcmp.eq.s32.totalorder %v850, 1
  %vm855 = vcmp.eq.s32.totalorder %v851, 1
  %vm856 = vcmp.eq.s32.totalorder %v852, 1
  %vm857 = vcmp.eq.s32.totalorder %v853, 1
  %v858 = vsel %vm854, %v845, 0.0
  %v859 = vsel %vm855, %v844, 0.0
  %v860 = vsel %vm856, %v843, 0.0
  %v861 = vsel %vm857, %v842, 0.0
  %862 = vrot.lane.b32.xlu0 %v394, 33
  %v863 = vpop.permute.xlu0 %862
  %864 = vrot.lane.b32.xlu0 %v395, 33
  %v865 = vpop.permute.xlu0 %864
  %866 = vrot.lane.b32.xlu0 %v396, 33
  %v867 = vpop.permute.xlu0 %866
  %868 = vrot.lane.b32.xlu0 %v397, 33
  %v869 = vpop.permute.xlu0 %868
  %vm870 = vcmp.lt.s32.totalorder %v49, 33
  %v871 = vsel %vm870, %v867, %v869
  %v872 = vsel %vm870, %v865, %v867
  %v873 = vsel %vm870, %v863, %v865
  %v874 = vsel %vm870, %v869, %v863
  %vm875 = vmand %vm65, %vm85
  %vm876 = vmand %vm66, %vm86
  %vm877 = vmand %vm67, %vm87
  %vm878 = vmand %vm68, %vm88
  %v879 = vsel %vm875, 1, 0
  %v880 = vsel %vm876, 1, 0
  %v881 = vsel %vm877, 1, 0
  %v882 = vsel %vm878, 1, 0
  %vm883 = vcmp.eq.s32.totalorder %v879, 1
  %vm884 = vcmp.eq.s32.totalorder %v880, 1
  %vm885 = vcmp.eq.s32.totalorder %v881, 1
  %vm886 = vcmp.eq.s32.totalorder %v882, 1
  %v887 = vsel %vm883, %v874, 0.0
  %v888 = vsel %vm884, %v873, 0.0
  %v889 = vsel %vm885, %v872, 0.0
  %v890 = vsel %vm886, %v871, 0.0
  %891 = vrot.lane.b32.xlu0 %v394, 32
  %v892 = vpop.permute.xlu0 %891
  %893 = vrot.lane.b32.xlu0 %v395, 32
  %v894 = vpop.permute.xlu0 %893
  %895 = vrot.lane.b32.xlu0 %v396, 32
  %v896 = vpop.permute.xlu0 %895
  %897 = vrot.lane.b32.xlu0 %v397, 32
  %v898 = vpop.permute.xlu0 %897
  %vm899 = vcmp.lt.s32.totalorder %v49, 32
  %v900 = vsel %vm899, %v896, %v898
  %v901 = vsel %vm899, %v894, %v896
  %v902 = vsel %vm899, %v892, %v894
  %v903 = vsel %vm899, %v898, %v892
  %v904 = vsel %vm65, 1, 0
  %v905 = vsel %vm66, 1, 0
  %v906 = vsel %vm67, 1, 0
  %v907 = vsel %vm68, 1, 0
  %vm908 = vcmp.eq.s32.totalorder %v904, 1
  %vm909 = vcmp.eq.s32.totalorder %v905, 1
  %vm910 = vcmp.eq.s32.totalorder %v906, 1
  %vm911 = vcmp.eq.s32.totalorder %v907, 1
  %v912 = vsel %vm908, %v903, 0.0
  %v913 = vsel %vm909, %v902, 0.0
  %v914 = vsel %vm910, %v901, 0.0
  %v915 = vsel %vm911, %v900, 0.0
  %916 = vrot.lane.b32.xlu0 %v394, 31
  %v917 = vpop.permute.xlu0 %916
  %918 = vrot.lane.b32.xlu0 %v395, 31
  %v919 = vpop.permute.xlu0 %918
  %920 = vrot.lane.b32.xlu0 %v396, 31
  %v921 = vpop.permute.xlu0 %920
  %922 = vrot.lane.b32.xlu0 %v397, 31
  %v923 = vpop.permute.xlu0 %922
  %vm924 = vcmp.lt.s32.totalorder %v49, 31
  %v925 = vsel %vm924, %v921, %v923
  %v926 = vsel %vm924, %v919, %v921
  %v927 = vsel %vm924, %v917, %v919
  %v928 = vsel %vm924, %v923, %v917
  %vm929 = vmand %vm65, %vm89
  %vm930 = vmand %vm66, %vm90
  %vm931 = vmand %vm67, %vm91
  %vm932 = vmand %vm68, %vm92
  %v933 = vsel %vm929, 1, 0
  %v934 = vsel %vm930, 1, 0
  %v935 = vsel %vm931, 1, 0
  %v936 = vsel %vm932, 1, 0
  %vm937 = vcmp.eq.s32.totalorder %v933, 1
  %vm938 = vcmp.eq.s32.totalorder %v934, 1
  %vm939 = vcmp.eq.s32.totalorder %v935, 1
  %vm940 = vcmp.eq.s32.totalorder %v936, 1
  %v941 = vsel %vm937, %v928, 0.0
  %v942 = vsel %vm938, %v927, 0.0
  %v943 = vsel %vm939, %v926, 0.0
  %v944 = vsel %vm940, %v925, 0.0
  %945 = vrot.lane.b32.xlu0 %v394, 30
  %v946 = vpop.permute.xlu0 %945
  %947 = vrot.lane.b32.xlu0 %v395, 30
  %v948 = vpop.permute.xlu0 %947
  %949 = vrot.lane.b32.xlu0 %v396, 30
  %v950 = vpop.permute.xlu0 %949
  %951 = vrot.lane.b32.xlu0 %v397, 30
  %v952 = vpop.permute.xlu0 %951
  %vm953 = vcmp.lt.s32.totalorder %v49, 30
  %v954 = vsel %vm953, %v950, %v952
  %v955 = vsel %vm953, %v948, %v950
  %v956 = vsel %vm953, %v946, %v948
  %v957 = vsel %vm953, %v952, %v946
  %vm958 = vmand %vm65, %vm93
  %vm959 = vmand %vm66, %vm94
  %vm960 = vmand %vm67, %vm95
  %vm961 = vmand %vm68, %vm96
  %v962 = vsel %vm958, 1, 0
  %v963 = vsel %vm959, 1, 0
  %v964 = vsel %vm960, 1, 0
  %v965 = vsel %vm961, 1, 0
  %vm966 = vcmp.eq.s32.totalorder %v962, 1
  %vm967 = vcmp.eq.s32.totalorder %v963, 1
  %vm968 = vcmp.eq.s32.totalorder %v964, 1
  %vm969 = vcmp.eq.s32.totalorder %v965, 1
  %v970 = vsel %vm966, %v957, 0.0
  %v971 = vsel %vm967, %v956, 0.0
  %v972 = vsel %vm968, %v955, 0.0
  %v973 = vsel %vm969, %v954, 0.0
  %974 = vrot.lane.b32.xlu0 %v394, 18
  %v975 = vpop.permute.xlu0 %974
  %976 = vrot.lane.b32.xlu0 %v395, 18
  %v977 = vpop.permute.xlu0 %976
  %978 = vrot.lane.b32.xlu0 %v396, 18
  %v979 = vpop.permute.xlu0 %978
  %980 = vrot.lane.b32.xlu0 %v397, 18
  %v981 = vpop.permute.xlu0 %980
  %vm982 = vcmp.lt.s32.totalorder %v49, 18
  %v983 = vsel %vm982, %v979, %v981
  %v984 = vsel %vm982, %v977, %v979
  %v985 = vsel %vm982, %v975, %v977
  %v986 = vsel %vm982, %v981, %v975
  %vm987 = vmand %vm69, %vm81
  %vm988 = vmand %vm70, %vm82
  %vm989 = vmand %vm71, %vm83
  %vm990 = vmand %vm72, %vm84
  %v991 = vsel %vm987, 1, 0
  %v992 = vsel %vm988, 1, 0
  %v993 = vsel %vm989, 1, 0
  %v994 = vsel %vm990, 1, 0
  %vm995 = vcmp.eq.s32.totalorder %v991, 1
  %vm996 = vcmp.eq.s32.totalorder %v992, 1
  %vm997 = vcmp.eq.s32.totalorder %v993, 1
  %vm998 = vcmp.eq.s32.totalorder %v994, 1
  %v999 = vsel %vm995, %v986, 0.0
  %v1000 = vsel %vm996, %v985, 0.0
  %v1001 = vsel %vm997, %v984, 0.0
  %v1002 = vsel %vm998, %v983, 0.0
  %1003 = vrot.lane.b32.xlu0 %v394, 17
  %v1004 = vpop.permute.xlu0 %1003
  %1005 = vrot.lane.b32.xlu0 %v395, 17
  %v1006 = vpop.permute.xlu0 %1005
  %1007 = vrot.lane.b32.xlu0 %v396, 17
  %v1008 = vpop.permute.xlu0 %1007
  %1009 = vrot.lane.b32.xlu0 %v397, 17
  %v1010 = vpop.permute.xlu0 %1009
  %v1011 = vsel %vm406, %v1008, %v1010
  %v1012 = vsel %vm406, %v1006, %v1008
  %v1013 = vsel %vm406, %v1004, %v1006
  %v1014 = vsel %vm406, %v1010, %v1004
  %v1015 = vsel %vm419, %v1014, 0.0
  %v1016 = vsel %vm420, %v1013, 0.0
  %v1017 = vsel %vm421, %v1012, 0.0
  %v1018 = vsel %vm422, %v1011, 0.0
  %1019 = vrot.lane.b32.xlu0 %v394, 16
  %v1020 = vpop.permute.xlu0 %1019
  %1021 = vrot.lane.b32.xlu0 %v395, 16
  %v1022 = vpop.permute.xlu0 %1021
  %1023 = vrot.lane.b32.xlu0 %v396, 16
  %v1024 = vpop.permute.xlu0 %1023
  %1025 = vrot.lane.b32.xlu0 %v397, 16
  %v1026 = vpop.permute.xlu0 %1025
  %v1027 = vsel %vm435, %v1024, %v1026
  %v1028 = vsel %vm435, %v1022, %v1024
  %v1029 = vsel %vm435, %v1020, %v1022
  %v1030 = vsel %vm435, %v1026, %v1020
  %v1031 = vsel %vm444, %v1030, 0.0
  %v1032 = vsel %vm445, %v1029, 0.0
  %v1033 = vsel %vm446, %v1028, 0.0
  %v1034 = vsel %vm447, %v1027, 0.0
  %1035 = vrot.lane.b32.xlu0 %v394, 15
  %v1036 = vpop.permute.xlu0 %1035
  %1037 = vrot.lane.b32.xlu0 %v395, 15
  %v1038 = vpop.permute.xlu0 %1037
  %1039 = vrot.lane.b32.xlu0 %v396, 15
  %v1040 = vpop.permute.xlu0 %1039
  %1041 = vrot.lane.b32.xlu0 %v397, 15
  %v1042 = vpop.permute.xlu0 %1041
  %v1043 = vsel %vm460, %v1040, %v1042
  %v1044 = vsel %vm460, %v1038, %v1040
  %v1045 = vsel %vm460, %v1036, %v1038
  %v1046 = vsel %vm460, %v1042, %v1036
  %v1047 = vsel %vm473, %v1046, 0.0
  %v1048 = vsel %vm474, %v1045, 0.0
  %v1049 = vsel %vm475, %v1044, 0.0
  %v1050 = vsel %vm476, %v1043, 0.0
  %1051 = vrot.lane.b32.xlu0 %v394, 14
  %v1052 = vpop.permute.xlu0 %1051
  %1053 = vrot.lane.b32.xlu0 %v395, 14
  %v1054 = vpop.permute.xlu0 %1053
  %1055 = vrot.lane.b32.xlu0 %v396, 14
  %v1056 = vpop.permute.xlu0 %1055
  %1057 = vrot.lane.b32.xlu0 %v397, 14
  %v1058 = vpop.permute.xlu0 %1057
  %vm1059 = vcmp.lt.s32.totalorder %v49, 14
  %v1060 = vsel %vm1059, %v1056, %v1058
  %v1061 = vsel %vm1059, %v1054, %v1056
  %v1062 = vsel %vm1059, %v1052, %v1054
  %v1063 = vsel %vm1059, %v1058, %v1052
  %vm1064 = vmand %vm69, %vm93
  %vm1065 = vmand %vm70, %vm94
  %vm1066 = vmand %vm71, %vm95
  %vm1067 = vmand %vm72, %vm96
  %v1068 = vsel %vm1064, 1, 0
  %v1069 = vsel %vm1065, 1, 0
  %v1070 = vsel %vm1066, 1, 0
  %v1071 = vsel %vm1067, 1, 0
  %vm1072 = vcmp.eq.s32.totalorder %v1068, 1
  %vm1073 = vcmp.eq.s32.totalorder %v1069, 1
  %vm1074 = vcmp.eq.s32.totalorder %v1070, 1
  %vm1075 = vcmp.eq.s32.totalorder %v1071, 1
  %v1076 = vsel %vm1072, %v1063, 0.0
  %v1077 = vsel %vm1073, %v1062, 0.0
  %v1078 = vsel %vm1074, %v1061, 0.0
  %v1079 = vsel %vm1075, %v1060, 0.0
  %1080 = vrot.lane.b32.xlu0 %v394, 2
  %v1081 = vpop.permute.xlu0 %1080
  %1082 = vrot.lane.b32.xlu0 %v395, 2
  %v1083 = vpop.permute.xlu0 %1082
  %1084 = vrot.lane.b32.xlu0 %v396, 2
  %v1085 = vpop.permute.xlu0 %1084
  %1086 = vrot.lane.b32.xlu0 %v397, 2
  %v1087 = vpop.permute.xlu0 %1086
  %vm1088 = vcmp.lt.s32.totalorder %v49, 2
  %v1089 = vsel %vm1088, %v1085, %v1087
  %v1090 = vsel %vm1088, %v1083, %v1085
  %v1091 = vsel %vm1088, %v1081, %v1083
  %v1092 = vsel %vm1088, %v1087, %v1081
  %v1093 = vsel %vm81, 1, 0
  %v1094 = vsel %vm82, 1, 0
  %v1095 = vsel %vm83, 1, 0
  %v1096 = vsel %vm84, 1, 0
  %vm1097 = vcmp.eq.s32.totalorder %v1093, 1
  %vm1098 = vcmp.eq.s32.totalorder %v1094, 1
  %vm1099 = vcmp.eq.s32.totalorder %v1095, 1
  %vm1100 = vcmp.eq.s32.totalorder %v1096, 1
  %v1101 = vsel %vm1097, %v1092, 0.0
  %v1102 = vsel %vm1098, %v1091, 0.0
  %v1103 = vsel %vm1099, %v1090, 0.0
  %v1104 = vsel %vm1100, %v1089, 0.0
  %1105 = vrot.lane.b32.xlu0 %v394, 1
  %v1106 = vpop.permute.xlu0 %1105
  %1107 = vrot.lane.b32.xlu0 %v395, 1
  %v1108 = vpop.permute.xlu0 %1107
  %1109 = vrot.lane.b32.xlu0 %v396, 1
  %v1110 = vpop.permute.xlu0 %1109
  %1111 = vrot.lane.b32.xlu0 %v397, 1
  %v1112 = vpop.permute.xlu0 %1111
  %v1113 = vsel %vm489, %v1110, %v1112
  %v1114 = vsel %vm489, %v1108, %v1110
  %v1115 = vsel %vm489, %v1106, %v1108
  %v1116 = vsel %vm489, %v1112, %v1106
  %v1117 = vsel %vm498, %v1116, 0.0
  %v1118 = vsel %vm499, %v1115, 0.0
  %v1119 = vsel %vm500, %v1114, 0.0
  %v1120 = vsel %vm501, %v1113, 0.0
  %1121 = vrot.lane.b32.xlu0 %v394, 127
  %v1122 = vpop.permute.xlu0 %1121
  %1123 = vrot.lane.b32.xlu0 %v395, 127
  %v1124 = vpop.permute.xlu0 %1123
  %1125 = vrot.lane.b32.xlu0 %v396, 127
  %v1126 = vpop.permute.xlu0 %1125
  %1127 = vrot.lane.b32.xlu0 %v397, 127
  %v1128 = vpop.permute.xlu0 %1127
  %v1129 = vsel %vm514, %v1126, %v1128
  %v1130 = vsel %vm514, %v1124, %v1126
  %v1131 = vsel %vm514, %v1122, %v1124
  %v1132 = vsel %vm514, %v1128, %v1122
  %v1133 = vsel %vm523, %v1131, 0.0
  %v1134 = vsel %vm524, %v1130, 0.0
  %v1135 = vsel %vm525, %v1129, 0.0
  %v1136 = vsel %vm526, %v1132, 0.0
  %1137 = vrot.lane.b32.xlu0 %v394, 126
  %v1138 = vpop.permute.xlu0 %1137
  %1139 = vrot.lane.b32.xlu0 %v395, 126
  %v1140 = vpop.permute.xlu0 %1139
  %1141 = vrot.lane.b32.xlu0 %v396, 126
  %v1142 = vpop.permute.xlu0 %1141
  %1143 = vrot.lane.b32.xlu0 %v397, 126
  %v1144 = vpop.permute.xlu0 %1143
  %vm1145 = vcmp.lt.s32.totalorder %v49, 126
  %v1146 = vsel %vm1145, %v1142, %v1144
  %v1147 = vsel %vm1145, %v1140, %v1142
  %v1148 = vsel %vm1145, %v1138, %v1140
  %v1149 = vsel %vm1145, %v1144, %v1138
  %v1150 = vsel %vm93, 1, 0
  %v1151 = vsel %vm94, 1, 0
  %v1152 = vsel %vm95, 1, 0
  %v1153 = vsel %vm96, 1, 0
  %vm1154 = vcmp.eq.s32.totalorder %v1150, 1
  %vm1155 = vcmp.eq.s32.totalorder %v1151, 1
  %vm1156 = vcmp.eq.s32.totalorder %v1152, 1
  %vm1157 = vcmp.eq.s32.totalorder %v1153, 1
  %v1158 = vsel %vm1154, %v1148, 0.0
  %v1159 = vsel %vm1155, %v1147, 0.0
  %v1160 = vsel %vm1156, %v1146, 0.0
  %v1161 = vsel %vm1157, %v1149, 0.0
  %1162 = vrot.lane.b32.xlu0 %v394, 114
  %v1163 = vpop.permute.xlu0 %1162
  %1164 = vrot.lane.b32.xlu0 %v395, 114
  %v1165 = vpop.permute.xlu0 %1164
  %1166 = vrot.lane.b32.xlu0 %v396, 114
  %v1167 = vpop.permute.xlu0 %1166
  %1168 = vrot.lane.b32.xlu0 %v397, 114
  %v1169 = vpop.permute.xlu0 %1168
  %vm1170 = vcmp.lt.s32.totalorder %v49, 114
  %v1171 = vsel %vm1170, %v1167, %v1169
  %v1172 = vsel %vm1170, %v1165, %v1167
  %v1173 = vsel %vm1170, %v1163, %v1165
  %v1174 = vsel %vm1170, %v1169, %v1163
  %vm1175 = vmand %vm73, %vm81
  %vm1176 = vmand %vm74, %vm82
  %vm1177 = vmand %vm75, %vm83
  %vm1178 = vmand %vm76, %vm84
  %v1179 = vsel %vm1175, 1, 0
  %v1180 = vsel %vm1176, 1, 0
  %v1181 = vsel %vm1177, 1, 0
  %v1182 = vsel %vm1178, 1, 0
  %vm1183 = vcmp.eq.s32.totalorder %v1179, 1
  %vm1184 = vcmp.eq.s32.totalorder %v1180, 1
  %vm1185 = vcmp.eq.s32.totalorder %v1181, 1
  %vm1186 = vcmp.eq.s32.totalorder %v1182, 1
  %v1187 = vsel %vm1183, %v1173, 0.0
  %v1188 = vsel %vm1184, %v1172, 0.0
  %v1189 = vsel %vm1185, %v1171, 0.0
  %v1190 = vsel %vm1186, %v1174, 0.0
  %1191 = vrot.lane.b32.xlu0 %v394, 113
  %v1192 = vpop.permute.xlu0 %1191
  %1193 = vrot.lane.b32.xlu0 %v395, 113
  %v1194 = vpop.permute.xlu0 %1193
  %1195 = vrot.lane.b32.xlu0 %v396, 113
  %v1196 = vpop.permute.xlu0 %1195
  %1197 = vrot.lane.b32.xlu0 %v397, 113
  %v1198 = vpop.permute.xlu0 %1197
  %v1199 = vsel %vm539, %v1196, %v1198
  %v1200 = vsel %vm539, %v1194, %v1196
  %v1201 = vsel %vm539, %v1192, %v1194
  %v1202 = vsel %vm539, %v1198, %v1192
  %v1203 = vsel %vm552, %v1201, 0.0
  %v1204 = vsel %vm553, %v1200, 0.0
  %v1205 = vsel %vm554, %v1199, 0.0
  %v1206 = vsel %vm555, %v1202, 0.0
  %1207 = vrot.lane.b32.xlu0 %v394, 112
  %v1208 = vpop.permute.xlu0 %1207
  %1209 = vrot.lane.b32.xlu0 %v395, 112
  %v1210 = vpop.permute.xlu0 %1209
  %1211 = vrot.lane.b32.xlu0 %v396, 112
  %v1212 = vpop.permute.xlu0 %1211
  %1213 = vrot.lane.b32.xlu0 %v397, 112
  %v1214 = vpop.permute.xlu0 %1213
  %v1215 = vsel %vm568, %v1212, %v1214
  %v1216 = vsel %vm568, %v1210, %v1212
  %v1217 = vsel %vm568, %v1208, %v1210
  %v1218 = vsel %vm568, %v1214, %v1208
  %v1219 = vsel %vm577, %v1217, 0.0
  %v1220 = vsel %vm578, %v1216, 0.0
  %v1221 = vsel %vm579, %v1215, 0.0
  %v1222 = vsel %vm580, %v1218, 0.0
  %1223 = vrot.lane.b32.xlu0 %v394, 111
  %v1224 = vpop.permute.xlu0 %1223
  %1225 = vrot.lane.b32.xlu0 %v395, 111
  %v1226 = vpop.permute.xlu0 %1225
  %1227 = vrot.lane.b32.xlu0 %v396, 111
  %v1228 = vpop.permute.xlu0 %1227
  %1229 = vrot.lane.b32.xlu0 %v397, 111
  %v1230 = vpop.permute.xlu0 %1229
  %v1231 = vsel %vm593, %v1228, %v1230
  %v1232 = vsel %vm593, %v1226, %v1228
  %v1233 = vsel %vm593, %v1224, %v1226
  %v1234 = vsel %vm593, %v1230, %v1224
  %v1235 = vsel %vm606, %v1233, 0.0
  %v1236 = vsel %vm607, %v1232, 0.0
  %v1237 = vsel %vm608, %v1231, 0.0
  %v1238 = vsel %vm609, %v1234, 0.0
  %1239 = vrot.lane.b32.xlu0 %v394, 110
  %v1240 = vpop.permute.xlu0 %1239
  %1241 = vrot.lane.b32.xlu0 %v395, 110
  %v1242 = vpop.permute.xlu0 %1241
  %1243 = vrot.lane.b32.xlu0 %v396, 110
  %v1244 = vpop.permute.xlu0 %1243
  %1245 = vrot.lane.b32.xlu0 %v397, 110
  %v1246 = vpop.permute.xlu0 %1245
  %vm1247 = vcmp.lt.s32.totalorder %v49, 110
  %v1248 = vsel %vm1247, %v1244, %v1246
  %v1249 = vsel %vm1247, %v1242, %v1244
  %v1250 = vsel %vm1247, %v1240, %v1242
  %v1251 = vsel %vm1247, %v1246, %v1240
  %vm1252 = vmand %vm73, %vm93
  %vm1253 = vmand %vm74, %vm94
  %vm1254 = vmand %vm75, %vm95
  %vm1255 = vmand %vm76, %vm96
  %v1256 = vsel %vm1252, 1, 0
  %v1257 = vsel %vm1253, 1, 0
  %v1258 = vsel %vm1254, 1, 0
  %v1259 = vsel %vm1255, 1, 0
  %vm1260 = vcmp.eq.s32.totalorder %v1256, 1
  %vm1261 = vcmp.eq.s32.totalorder %v1257, 1
  %vm1262 = vcmp.eq.s32.totalorder %v1258, 1
  %vm1263 = vcmp.eq.s32.totalorder %v1259, 1
  %v1264 = vsel %vm1260, %v1250, 0.0
  %v1265 = vsel %vm1261, %v1249, 0.0
  %v1266 = vsel %vm1262, %v1248, 0.0
  %v1267 = vsel %vm1263, %v1251, 0.0
  %1268 = vrot.lane.b32.xlu0 %v394, 98
  %v1269 = vpop.permute.xlu0 %1268
  %1270 = vrot.lane.b32.xlu0 %v395, 98
  %v1271 = vpop.permute.xlu0 %1270
  %1272 = vrot.lane.b32.xlu0 %v396, 98
  %v1273 = vpop.permute.xlu0 %1272
  %1274 = vrot.lane.b32.xlu0 %v397, 98
  %v1275 = vpop.permute.xlu0 %1274
  %vm1276 = vcmp.lt.s32.totalorder %v49, 98
  %v1277 = vsel %vm1276, %v1273, %v1275
  %v1278 = vsel %vm1276, %v1271, %v1273
  %v1279 = vsel %vm1276, %v1269, %v1271
  %v1280 = vsel %vm1276, %v1275, %v1269
  %vm1281 = vmand %vm77, %vm81
  %vm1282 = vmand %vm78, %vm82
  %vm1283 = vmand %vm79, %vm83
  %vm1284 = vmand %vm80, %vm84
  %v1285 = vsel %vm1281, 1, 0
  %v1286 = vsel %vm1282, 1, 0
  %v1287 = vsel %vm1283, 1, 0
  %v1288 = vsel %vm1284, 1, 0
  %vm1289 = vcmp.eq.s32.totalorder %v1285, 1
  %vm1290 = vcmp.eq.s32.totalorder %v1286, 1
  %vm1291 = vcmp.eq.s32.totalorder %v1287, 1
  %vm1292 = vcmp.eq.s32.totalorder %v1288, 1
  %v1293 = vsel %vm1289, %v1279, 0.0
  %v1294 = vsel %vm1290, %v1278, 0.0
  %v1295 = vsel %vm1291, %v1277, 0.0
  %v1296 = vsel %vm1292, %v1280, 0.0
  %1297 = vrot.lane.b32.xlu0 %v394, 97
  %v1298 = vpop.permute.xlu0 %1297
  %1299 = vrot.lane.b32.xlu0 %v395, 97
  %v1300 = vpop.permute.xlu0 %1299
  %1301 = vrot.lane.b32.xlu0 %v396, 97
  %v1302 = vpop.permute.xlu0 %1301
  %1303 = vrot.lane.b32.xlu0 %v397, 97
  %v1304 = vpop.permute.xlu0 %1303
  %vm1305 = vcmp.lt.s32.totalorder %v49, 97
  %v1306 = vsel %vm1305, %v1302, %v1304
  %v1307 = vsel %vm1305, %v1300, %v1302
  %v1308 = vsel %vm1305, %v1298, %v1300
  %v1309 = vsel %vm1305, %v1304, %v1298
  %vm1310 = vmand %vm77, %vm85
  %vm1311 = vmand %vm78, %vm86
  %vm1312 = vmand %vm79, %vm87
  %vm1313 = vmand %vm80, %vm88
  %v1314 = vsel %vm1310, 1, 0
  %v1315 = vsel %vm1311, 1, 0
  %v1316 = vsel %vm1312, 1, 0
  %v1317 = vsel %vm1313, 1, 0
  %vm1318 = vcmp.eq.s32.totalorder %v1314, 1
  %vm1319 = vcmp.eq.s32.totalorder %v1315, 1
  %vm1320 = vcmp.eq.s32.totalorder %v1316, 1
  %vm1321 = vcmp.eq.s32.totalorder %v1317, 1
  %v1322 = vsel %vm1318, %v1308, 0.0
  %v1323 = vsel %vm1319, %v1307, 0.0
  %v1324 = vsel %vm1320, %v1306, 0.0
  %v1325 = vsel %vm1321, %v1309, 0.0
  %1326 = vrot.lane.b32.xlu0 %v394, 96
  %v1327 = vpop.permute.xlu0 %1326
  %1328 = vrot.lane.b32.xlu0 %v395, 96
  %v1329 = vpop.permute.xlu0 %1328
  %1330 = vrot.lane.b32.xlu0 %v396, 96
  %v1331 = vpop.permute.xlu0 %1330
  %1332 = vrot.lane.b32.xlu0 %v397, 96
  %v1333 = vpop.permute.xlu0 %1332
  %vm1334 = vcmp.lt.s32.totalorder %v49, 96
  %v1335 = vsel %vm1334, %v1331, %v1333
  %v1336 = vsel %vm1334, %v1329, %v1331
  %v1337 = vsel %vm1334, %v1327, %v1329
  %v1338 = vsel %vm1334, %v1333, %v1327
  %v1339 = vsel %vm77, 1, 0
  %v1340 = vsel %vm78, 1, 0
  %v1341 = vsel %vm79, 1, 0
  %v1342 = vsel %vm80, 1, 0
  %vm1343 = vcmp.eq.s32.totalorder %v1339, 1
  %vm1344 = vcmp.eq.s32.totalorder %v1340, 1
  %vm1345 = vcmp.eq.s32.totalorder %v1341, 1
  %vm1346 = vcmp.eq.s32.totalorder %v1342, 1
  %v1347 = vsel %vm1343, %v1337, 0.0
  %v1348 = vsel %vm1344, %v1336, 0.0
  %v1349 = vsel %vm1345, %v1335, 0.0
  %v1350 = vsel %vm1346, %v1338, 0.0
  %1351 = vrot.lane.b32.xlu0 %v394, 95
  %v1352 = vpop.permute.xlu0 %1351
  %1353 = vrot.lane.b32.xlu0 %v395, 95
  %v1354 = vpop.permute.xlu0 %1353
  %1355 = vrot.lane.b32.xlu0 %v396, 95
  %v1356 = vpop.permute.xlu0 %1355
  %1357 = vrot.lane.b32.xlu0 %v397, 95
  %v1358 = vpop.permute.xlu0 %1357
  %vm1359 = vcmp.lt.s32.totalorder %v49, 95
  %v1360 = vsel %vm1359, %v1356, %v1358
  %v1361 = vsel %vm1359, %v1354, %v1356
  %v1362 = vsel %vm1359, %v1352, %v1354
  %v1363 = vsel %vm1359, %v1358, %v1352
  %vm1364 = vmand %vm77, %vm89
  %vm1365 = vmand %vm78, %vm90
  %vm1366 = vmand %vm79, %vm91
  %vm1367 = vmand %vm80, %vm92
  %v1368 = vsel %vm1364, 1, 0
  %v1369 = vsel %vm1365, 1, 0
  %v1370 = vsel %vm1366, 1, 0
  %v1371 = vsel %vm1367, 1, 0
  %vm1372 = vcmp.eq.s32.totalorder %v1368, 1
  %vm1373 = vcmp.eq.s32.totalorder %v1369, 1
  %vm1374 = vcmp.eq.s32.totalorder %v1370, 1
  %vm1375 = vcmp.eq.s32.totalorder %v1371, 1
  %v1376 = vsel %vm1372, %v1362, 0.0
  %v1377 = vsel %vm1373, %v1361, 0.0
  %v1378 = vsel %vm1374, %v1360, 0.0
  %v1379 = vsel %vm1375, %v1363, 0.0
  %1380 = vrot.lane.b32.xlu0 %v394, 94
  %v1381 = vpop.permute.xlu0 %1380
  %1382 = vrot.lane.b32.xlu0 %v395, 94
  %v1383 = vpop.permute.xlu0 %1382
  %1384 = vrot.lane.b32.xlu0 %v396, 94
  %v1385 = vpop.permute.xlu0 %1384
  %1386 = vrot.lane.b32.xlu0 %v397, 94
  %v1387 = vpop.permute.xlu0 %1386
  %vm1388 = vcmp.lt.s32.totalorder %v49, 94
  %v1389 = vsel %vm1388, %v1385, %v1387
  %v1390 = vsel %vm1388, %v1383, %v1385
  %v1391 = vsel %vm1388, %v1381, %v1383
  %v1392 = vsel %vm1388, %v1387, %v1381
  %vm1393 = vmand %vm77, %vm93
  %vm1394 = vmand %vm78, %vm94
  %vm1395 = vmand %vm79, %vm95
  %vm1396 = vmand %vm80, %vm96
  %v1397 = vsel %vm1393, 1, 0
  %v1398 = vsel %vm1394, 1, 0
  %v1399 = vsel %vm1395, 1, 0
  %v1400 = vsel %vm1396, 1, 0
  %vm1401 = vcmp.eq.s32.totalorder %v1397, 1
  %vm1402 = vcmp.eq.s32.totalorder %v1398, 1
  %vm1403 = vcmp.eq.s32.totalorder %v1399, 1
  %vm1404 = vcmp.eq.s32.totalorder %v1400, 1
  %v1405 = vsel %vm1401, %v1391, 0.0
  %v1406 = vsel %vm1402, %v1390, 0.0
  %v1407 = vsel %vm1403, %v1389, 0.0
  %v1408 = vsel %vm1404, %v1392, 0.0
  %v1409 = vld [vmem:[%s7] sm:$0xff]
  %v1410 = vld [vmem:[%s7 + $0x8] sm:$0xff]
  %v1412 = vsel %vm616, %v1410, 0
  %1414 = vmatpush.msra.mxu0 %v1187
  %1415 = vmatpush.msra.mxu0 %v1158
  %1416 = vmatpush.msra.mxu0 %v1133
  %1417 = vmatpush.msra.mxu0 %v394
  %1418 = vmatpush.msra.mxu0 %v1117
  %1419 = vmatpush.msra.mxu0 %v1101
  %1420 = vmatpush.msra.mxu0 %v1076
  %1421 = vmatpush.msra.mxu0 %v1047
  %1422 = vmatpush.msra.mxu0 %v1031
  %1423 = vmatpush.msra.mxu0 %v1015
  %1424 = vmatpush.msra.mxu0 %v999
  %1425 = vmatpush.msra.mxu0 %v970
  %1426 = vmatpush.msra.mxu0 %v941
  %1427 = vmatpush.msra.mxu0 %v912
  %1428 = vmatpush.msra.mxu0 %v887
  %1429 = vmatpush.msra.mxu0 %v858
  %1430 = vmatmul.f32.gmra.mxu0 %v1409
  %v1431 = vpop.f32.mrf.mxu0
  %v1432 = vadd.f32 0.0, %v1431
  %1433 = vdwg.mxu0
  %1434 = vmatpush.msra.mxu0 0.0
  %1435 = vmatpush.msra.mxu0 0.0
  %1436 = vmatpush.msra.mxu0 0.0
  %1437 = vmatpush.msra.mxu0 0.0
  %1438 = vmatpush.msra.mxu0 0.0
  %1439 = vmatpush.msra.mxu0 0.0
  %1440 = vmatpush.msra.mxu0 1.0
  %1441 = vmatpush.msra.mxu0 %v1405
  %1442 = vmatpush.msra.mxu0 %v1376
  %1443 = vmatpush.msra.mxu0 %v1347
  %1444 = vmatpush.msra.mxu0 %v1322
  %1445 = vmatpush.msra.mxu0 %v1293
  %1446 = vmatpush.msra.mxu0 %v1264
  %1447 = vmatpush.msra.mxu0 %v1235
  %1448 = vmatpush.msra.mxu0 %v1219
  %1449 = vmatpush.msra.mxu0 %v1203
  %1450 = vmatmul.f32.gmra.mxu0 %v1412
  %v1451 = vpop.f32.mrf.mxu0
  %v1452 = vadd.f32 %v1432, %v1451
  %1453 = vdwg.mxu0
  %1454 = vmatpush.msra.mxu0 %v1188
  %1455 = vmatpush.msra.mxu0 %v1159
  %1456 = vmatpush.msra.mxu0 %v1134
  %1457 = vmatpush.msra.mxu0 %v395
  %1458 = vmatpush.msra.mxu0 %v1118
  %1459 = vmatpush.msra.mxu0 %v1102
  %1460 = vmatpush.msra.mxu0 %v1077
  %1461 = vmatpush.msra.mxu0 %v1048
  %1462 = vmatpush.msra.mxu0 %v1032
  %1463 = vmatpush.msra.mxu0 %v1016
  %1464 = vmatpush.msra.mxu0 %v1000
  %1465 = vmatpush.msra.mxu0 %v971
  %1466 = vmatpush.msra.mxu0 %v942
  %1467 = vmatpush.msra.mxu0 %v913
  %1468 = vmatpush.msra.mxu0 %v888
  %1469 = vmatpush.msra.mxu0 %v859
  %1470 = vmatmul.f32.gmra.mxu0 %v1409
  %v1471 = vpop.f32.mrf.mxu0
  %v1472 = vadd.f32 0.0, %v1471
  %1473 = vdwg.mxu0
  %1474 = vmatpush.msra.mxu0 0.0
  %1475 = vmatpush.msra.mxu0 0.0
  %1476 = vmatpush.msra.mxu0 0.0
  %1477 = vmatpush.msra.mxu0 0.0
  %1478 = vmatpush.msra.mxu0 0.0
  %1479 = vmatpush.msra.mxu0 0.0
  %1480 = vmatpush.msra.mxu0 1.0
  %1481 = vmatpush.msra.mxu0 %v1406
  %1482 = vmatpush.msra.mxu0 %v1377
  %1483 = vmatpush.msra.mxu0 %v1348
  %1484 = vmatpush.msra.mxu0 %v1323
  %1485 = vmatpush.msra.mxu0 %v1294
  %1486 = vmatpush.msra.mxu0 %v1265
  %1487 = vmatpush.msra.mxu0 %v1236
  %1488 = vmatpush.msra.mxu0 %v1220
  %1489 = vmatpush.msra.mxu0 %v1204
  %1490 = vmatmul.f32.gmra.mxu0 %v1412
  %v1491 = vpop.f32.mrf.mxu0
  %v1492 = vadd.f32 %v1472, %v1491
  %1493 = vdwg.mxu0
  %1494 = vmatpush.msra.mxu0 %v1189
  %1495 = vmatpush.msra.mxu0 %v1160
  %1496 = vmatpush.msra.mxu0 %v1135
  %1497 = vmatpush.msra.mxu0 %v396
  %1498 = vmatpush.msra.mxu0 %v1119
  %1499 = vmatpush.msra.mxu0 %v1103
  %1500 = vmatpush.msra.mxu0 %v1078
  %1501 = vmatpush.msra.mxu0 %v1049
  %1502 = vmatpush.msra.mxu0 %v1033
  %1503 = vmatpush.msra.mxu0 %v1017
  %1504 = vmatpush.msra.mxu0 %v1001
  %1505 = vmatpush.msra.mxu0 %v972
  %1506 = vmatpush.msra.mxu0 %v943
  %1507 = vmatpush.msra.mxu0 %v914
  %1508 = vmatpush.msra.mxu0 %v889
  %1509 = vmatpush.msra.mxu0 %v860
  %1510 = vmatmul.f32.gmra.mxu0 %v1409
  %v1511 = vpop.f32.mrf.mxu0
  %v1512 = vadd.f32 0.0, %v1511
  %1513 = vdwg.mxu0
  %1514 = vmatpush.msra.mxu0 0.0
  %1515 = vmatpush.msra.mxu0 0.0
  %1516 = vmatpush.msra.mxu0 0.0
  %1517 = vmatpush.msra.mxu0 0.0
  %1518 = vmatpush.msra.mxu0 0.0
  %1519 = vmatpush.msra.mxu0 0.0
  %1520 = vmatpush.msra.mxu0 1.0
  %1521 = vmatpush.msra.mxu0 %v1407
  %1522 = vmatpush.msra.mxu0 %v1378
  %1523 = vmatpush.msra.mxu0 %v1349
  %1524 = vmatpush.msra.mxu0 %v1324
  %1525 = vmatpush.msra.mxu0 %v1295
  %1526 = vmatpush.msra.mxu0 %v1266
  %1527 = vmatpush.msra.mxu0 %v1237
  %1528 = vmatpush.msra.mxu0 %v1221
  %1529 = vmatpush.msra.mxu0 %v1205
  %1530 = vmatmul.f32.gmra.mxu0 %v1412
  %v1531 = vpop.f32.mrf.mxu0
  %v1532 = vadd.f32 %v1512, %v1531
  %1533 = vdwg.mxu0
  %1534 = vmatpush.msra.mxu0 %v1190
  %1535 = vmatpush.msra.mxu0 %v1161
  %1536 = vmatpush.msra.mxu0 %v1136
  %1537 = vmatpush.msra.mxu0 %v397
  %1538 = vmatpush.msra.mxu0 %v1120
  %1539 = vmatpush.msra.mxu0 %v1104
  %1540 = vmatpush.msra.mxu0 %v1079
  %1541 = vmatpush.msra.mxu0 %v1050
  %1542 = vmatpush.msra.mxu0 %v1034
  %1543 = vmatpush.msra.mxu0 %v1018
  %1544 = vmatpush.msra.mxu0 %v1002
  %1545 = vmatpush.msra.mxu0 %v973
  %1546 = vmatpush.msra.mxu0 %v944
  %1547 = vmatpush.msra.mxu0 %v915
  %1548 = vmatpush.msra.mxu0 %v890
  %1549 = vmatpush.msra.mxu0 %v861
  %1550 = vmatmul.f32.gmra.mxu0 %v1409
  %v1551 = vpop.f32.mrf.mxu0
  %v1552 = vadd.f32 0.0, %v1551
  %1553 = vdwg.mxu0
  %1554 = vmatpush.msra.mxu0 0.0
  %1555 = vmatpush.msra.mxu0 0.0
  %1556 = vmatpush.msra.mxu0 0.0
  %1557 = vmatpush.msra.mxu0 0.0
  %1558 = vmatpush.msra.mxu0 0.0
  %1559 = vmatpush.msra.mxu0 0.0
  %1560 = vmatpush.msra.mxu0 1.0
  %1561 = vmatpush.msra.mxu0 %v1408
  %1562 = vmatpush.msra.mxu0 %v1379
  %1563 = vmatpush.msra.mxu0 %v1350
  %1564 = vmatpush.msra.mxu0 %v1325
  %1565 = vmatpush.msra.mxu0 %v1296
  %1566 = vmatpush.msra.mxu0 %v1267
  %1567 = vmatpush.msra.mxu0 %v1238
  %1568 = vmatpush.msra.mxu0 %v1222
  %1569 = vmatpush.msra.mxu0 %v1206
  %1570 = vmatmul.f32.gmra.mxu0 %v1412
  %v1571 = vpop.f32.mrf.mxu0
  %v1572 = vadd.f32 %v1552, %v1571
  %1573 = vdwg.mxu0
  %v1574 = vld [vmem:[%s8] sm:$0xff]
  %v1575 = vld [vmem:[%s9] sm:$0xff]
  %v1576 = vmax.f32 %v1452, 0.0
  %v1577 = vmax.f32 %v1492, 0.0
  %v1578 = vmax.f32 %v1532, 0.0
  %v1579 = vmax.f32 %v1572, 0.0
  %v1580 = vadd.f32 %v1576, %v1577
  %v1581 = vadd.f32 %v1580, %v1578
  %v1582 = vadd.f32 %v1581, %v1579
  %1583 = vadd.xlane.f32.xlu0 %v1582
  %v1584 = vpop.xlane.xlu0 %1583
  %v1585 = vmul.f32 %v1584, %v253
  %v1586 = vsub.f32 %v1576, %v1585
  %v1587 = vsub.f32 %v1577, %v1585
  %v1588 = vsub.f32 %v1578, %v1585
  %v1589 = vsub.f32 %v1579, %v1585
  %v1590 = vmul.f32 %v1586, %v1586
  %v1591 = vmul.f32 %v1587, %v1587
  %v1592 = vmul.f32 %v1588, %v1588
  %v1593 = vmul.f32 %v1589, %v1589
  %v1594 = vadd.f32 %v1590, %v1591
  %v1595 = vadd.f32 %v1594, %v1592
  %v1596 = vadd.f32 %v1595, %v1593
  %1597 = vadd.xlane.f32.xlu0 %v1596
  %v1598 = vpop.xlane.xlu0 %1597
  %v1599 = vmul.f32 %v1598, %v253
  %1601 = vset.pattern.permute.xlu0 0
  %1602 = vperm.xlu0 %1601, %v1574
  %v1603 = vpop.permute.xlu0 %1602
  %v1605 = vmul.f32 %v1603, %v1586
  %v1606 = vmul.f32 %v1603, %v1587
  %v1607 = vmul.f32 %v1603, %v1588
  %v1608 = vmul.f32 %v1603, %v1589
  %v1609 = vadd.f32 %v1599, 1e-05
  %v1610 = vrsqrt.pop %v1609
  %v1611 = vmul.f32 %v1610, %v1609
  %v1612 = vmul.f32 %v1611, %v1610
  %v1613 = vmul.f32 0.5, %v1612
  %v1614 = vsub.f32 1.5, %v1613
  %v1615 = vmul.f32 %v1610, %v1614
  %vm1616 = vweird.f32 %v1609
  %vm1617 = vweird.f32 %v1610
  %vm1618 = vmor %vm1616, %vm1617
  %v1619 = vsel %vm1618, %v1610, %v1615
  %v1620 = vmul.f32 %v1605, %v1619
  %v1621 = vmul.f32 %v1606, %v1619
  %v1622 = vmul.f32 %v1607, %v1619
  %v1623 = vmul.f32 %v1608, %v1619
  %1625 = vset.pattern.permute.xlu0 0
  %1626 = vperm.xlu0 %1625, %v1575
  %v1627 = vpop.permute.xlu0 %1626
  %v1629 = vadd.f32 %v1620, %v1627
  %v1630 = vadd.f32 %v1621, %v1627
  %v1631 = vadd.f32 %v1622, %v1627
  %v1632 = vadd.f32 %v1623, %v1627
  %1633 = vrot.lane.b32.xlu0 %v44, 1
  %v1634 = vpop.permute.xlu0 %1633
  %1635 = vrot.lane.b32.xlu0 %v45, 1
  %v1636 = vpop.permute.xlu0 %1635
  %1637 = vrot.lane.b32.xlu0 %v46, 1
  %v1638 = vpop.permute.xlu0 %1637
  %1639 = vrot.lane.b32.xlu0 %v47, 1
  %v1640 = vpop.permute.xlu0 %1639
  %v1641 = vsel %vm489, %v1638, %v1640
  %v1642 = vsel %vm489, %v1636, %v1638
  %v1643 = vsel %vm489, %v1634, %v1636
  %v1644 = vsel %vm489, %v1640, %v1634
  %v1645 = vsel %vm498, %v1644, -inf
  %v1646 = vsel %vm499, %v1643, -inf
  %v1647 = vsel %vm500, %v1642, -inf
  %v1648 = vsel %vm501, %v1641, -inf
  %v1649 = vmax.f32 %v44, %v1645
  %v1650 = vmax.f32 %v45, %v1646
  %v1651 = vmax.f32 %v46, %v1647
  %v1652 = vmax.f32 %v47, %v1648
  %1653 = vrot.lane.b32.xlu0 %v44, 127
  %v1654 = vpop.permute.xlu0 %1653
  %1655 = vrot.lane.b32.xlu0 %v45, 127
  %v1656 = vpop.permute.xlu0 %1655
  %1657 = vrot.lane.b32.xlu0 %v46, 127
  %v1658 = vpop.permute.xlu0 %1657
  %1659 = vrot.lane.b32.xlu0 %v47, 127
  %v1660 = vpop.permute.xlu0 %1659
  %v1661 = vsel %vm514, %v1658, %v1660
  %v1662 = vsel %vm514, %v1656, %v1658
  %v1663 = vsel %vm514, %v1654, %v1656
  %v1664 = vsel %vm514, %v1660, %v1654
  %v1665 = vsel %vm523, %v1663, -inf
  %v1666 = vsel %vm524, %v1662, -inf
  %v1667 = vsel %vm525, %v1661, -inf
  %v1668 = vsel %vm526, %v1664, -inf
  %v1669 = vmax.f32 %v1649, %v1665
  %v1670 = vmax.f32 %v1650, %v1666
  %v1671 = vmax.f32 %v1651, %v1667
  %v1672 = vmax.f32 %v1652, %v1668
  %1673 = vrot.lane.b32.xlu0 %v1669, 16
  %v1674 = vpop.permute.xlu0 %1673
  %1675 = vrot.lane.b32.xlu0 %v1670, 16
  %v1676 = vpop.permute.xlu0 %1675
  %1677 = vrot.lane.b32.xlu0 %v1671, 16
  %v1678 = vpop.permute.xlu0 %1677
  %1679 = vrot.lane.b32.xlu0 %v1672, 16
  %v1680 = vpop.permute.xlu0 %1679
  %v1681 = vsel %vm435, %v1678, %v1680
  %v1682 = vsel %vm435, %v1676, %v1678
  %v1683 = vsel %vm435, %v1674, %v1676
  %v1684 = vsel %vm435, %v1680, %v1674
  %v1685 = vsel %vm444, %v1684, -inf
  %v1686 = vsel %vm445, %v1683, -inf
  %v1687 = vsel %vm446, %v1682, -inf
  %v1688 = vsel %vm447, %v1681, -inf
  %v1689 = vmax.f32 %v1669, %v1685
  %v1690 = vmax.f32 %v1670, %v1686
  %v1691 = vmax.f32 %v1671, %v1687
  %v1692 = vmax.f32 %v1672, %v1688
  %1693 = vrot.lane.b32.xlu0 %v1669, 112
  %v1694 = vpop.permute.xlu0 %1693
  %1695 = vrot.lane.b32.xlu0 %v1670, 112
  %v1696 = vpop.permute.xlu0 %1695
  %1697 = vrot.lane.b32.xlu0 %v1671, 112
  %v1698 = vpop.permute.xlu0 %1697
  %1699 = vrot.lane.b32.xlu0 %v1672, 112
  %v1700 = vpop.permute.xlu0 %1699
  %v1701 = vsel %vm568, %v1698, %v1700
  %v1702 = vsel %vm568, %v1696, %v1698
  %v1703 = vsel %vm568, %v1694, %v1696
  %v1704 = vsel %vm568, %v1700, %v1694
  %v1705 = vsel %vm577, %v1703, -inf
  %v1706 = vsel %vm578, %v1702, -inf
  %v1707 = vsel %vm579, %v1701, -inf
  %v1708 = vsel %vm580, %v1704, -inf
  %v1709 = vmax.f32 %v1689, %v1705
  %v1710 = vmax.f32 %v1690, %v1706
  %v1711 = vmax.f32 %v1691, %v1707
  %v1712 = vmax.f32 %v1692, %v1708
  %v1713 = vld [vmem:[%s10] sm:$0xff]
  %v1715 = vsel %vm100, %v1713, 0
  %1717 = vmatpush.msra.mxu0 0.0
  %1718 = vmatpush.msra.mxu0 0.0
  %1719 = vmatpush.msra.mxu0 0.0
  %1720 = vmatpush.msra.mxu0 0.0
  %1721 = vmatpush.msra.mxu0 0.0
  %1722 = vmatpush.msra.mxu0 0.0
  %1723 = vmatpush.msra.mxu0 0.0
  %1724 = vmatpush.msra.mxu0 0.0
  %1725 = vmatpush.msra.mxu0 0.0
  %1726 = vmatpush.msra.mxu0 0.0
  %1727 = vmatpush.msra.mxu0 0.0
  %1728 = vmatpush.msra.mxu0 0.0
  %1729 = vmatpush.msra.mxu0 0.0
  %1730 = vmatpush.msra.mxu0 0.0
  %1731 = vmatpush.msra.mxu0 1.0
  %1732 = vmatpush.msra.mxu0 %v1709
  %1733 = vmatmul.f32.gmra.mxu0 %v1715
  %v1734 = vpop.f32.mrf.mxu0
  %v1735 = vadd.f32 0.0, %v1734
  %1736 = vdwg.mxu0
  %1737 = vmatpush.msra.mxu0 0.0
  %1738 = vmatpush.msra.mxu0 0.0
  %1739 = vmatpush.msra.mxu0 0.0
  %1740 = vmatpush.msra.mxu0 0.0
  %1741 = vmatpush.msra.mxu0 0.0
  %1742 = vmatpush.msra.mxu0 0.0
  %1743 = vmatpush.msra.mxu0 0.0
  %1744 = vmatpush.msra.mxu0 0.0
  %1745 = vmatpush.msra.mxu0 0.0
  %1746 = vmatpush.msra.mxu0 0.0
  %1747 = vmatpush.msra.mxu0 0.0
  %1748 = vmatpush.msra.mxu0 0.0
  %1749 = vmatpush.msra.mxu0 0.0
  %1750 = vmatpush.msra.mxu0 0.0
  %1751 = vmatpush.msra.mxu0 1.0
  %1752 = vmatpush.msra.mxu0 %v1710
  %1753 = vmatmul.f32.gmra.mxu0 %v1715
  %v1754 = vpop.f32.mrf.mxu0
  %v1755 = vadd.f32 0.0, %v1754
  %1756 = vdwg.mxu0
  %1757 = vmatpush.msra.mxu0 0.0
  %1758 = vmatpush.msra.mxu0 0.0
  %1759 = vmatpush.msra.mxu0 0.0
  %1760 = vmatpush.msra.mxu0 0.0
  %1761 = vmatpush.msra.mxu0 0.0
  %1762 = vmatpush.msra.mxu0 0.0
  %1763 = vmatpush.msra.mxu0 0.0
  %1764 = vmatpush.msra.mxu0 0.0
  %1765 = vmatpush.msra.mxu0 0.0
  %1766 = vmatpush.msra.mxu0 0.0
  %1767 = vmatpush.msra.mxu0 0.0
  %1768 = vmatpush.msra.mxu0 0.0
  %1769 = vmatpush.msra.mxu0 0.0
  %1770 = vmatpush.msra.mxu0 0.0
  %1771 = vmatpush.msra.mxu0 1.0
  %1772 = vmatpush.msra.mxu0 %v1711
  %1773 = vmatmul.f32.gmra.mxu0 %v1715
  %v1774 = vpop.f32.mrf.mxu0
  %v1775 = vadd.f32 0.0, %v1774
  %1776 = vdwg.mxu0
  %1777 = vmatpush.msra.mxu0 0.0
  %1778 = vmatpush.msra.mxu0 0.0
  %1779 = vmatpush.msra.mxu0 0.0
  %1780 = vmatpush.msra.mxu0 0.0
  %1781 = vmatpush.msra.mxu0 0.0
  %1782 = vmatpush.msra.mxu0 0.0
  %1783 = vmatpush.msra.mxu0 0.0
  %1784 = vmatpush.msra.mxu0 0.0
  %1785 = vmatpush.msra.mxu0 0.0
  %1786 = vmatpush.msra.mxu0 0.0
  %1787 = vmatpush.msra.mxu0 0.0
  %1788 = vmatpush.msra.mxu0 0.0
  %1789 = vmatpush.msra.mxu0 0.0
  %1790 = vmatpush.msra.mxu0 0.0
  %1791 = vmatpush.msra.mxu0 1.0
  %1792 = vmatpush.msra.mxu0 %v1712
  %1793 = vmatmul.f32.gmra.mxu0 %v1715
  %v1794 = vpop.f32.mrf.mxu0
  %v1795 = vadd.f32 0.0, %v1794
  %1796 = vdwg.mxu0
  %v1797 = vld [vmem:[%s11] sm:$0xff]
  %v1798 = vld [vmem:[%s12] sm:$0xff]
  %v1799 = vmax.f32 %v1735, 0.0
  %v1800 = vmax.f32 %v1755, 0.0
  %v1801 = vmax.f32 %v1775, 0.0
  %v1802 = vmax.f32 %v1795, 0.0
  %v1803 = vadd.f32 %v1799, %v1800
  %v1804 = vadd.f32 %v1803, %v1801
  %v1805 = vadd.f32 %v1804, %v1802
  %1806 = vadd.xlane.f32.xlu0 %v1805
  %v1807 = vpop.xlane.xlu0 %1806
  %v1808 = vmul.f32 %v1807, %v253
  %v1809 = vsub.f32 %v1799, %v1808
  %v1810 = vsub.f32 %v1800, %v1808
  %v1811 = vsub.f32 %v1801, %v1808
  %v1812 = vsub.f32 %v1802, %v1808
  %v1813 = vmul.f32 %v1809, %v1809
  %v1814 = vmul.f32 %v1810, %v1810
  %v1815 = vmul.f32 %v1811, %v1811
  %v1816 = vmul.f32 %v1812, %v1812
  %v1817 = vadd.f32 %v1813, %v1814
  %v1818 = vadd.f32 %v1817, %v1815
  %v1819 = vadd.f32 %v1818, %v1816
  %1820 = vadd.xlane.f32.xlu0 %v1819
  %v1821 = vpop.xlane.xlu0 %1820
  %v1822 = vmul.f32 %v1821, %v253
  %1824 = vset.pattern.permute.xlu0 0
  %1825 = vperm.xlu0 %1824, %v1797
  %v1826 = vpop.permute.xlu0 %1825
  %v1828 = vmul.f32 %v1826, %v1809
  %v1829 = vmul.f32 %v1826, %v1810
  %v1830 = vmul.f32 %v1826, %v1811
  %v1831 = vmul.f32 %v1826, %v1812
  %v1832 = vadd.f32 %v1822, 1e-05
  %v1833 = vrsqrt.pop %v1832
  %v1834 = vmul.f32 %v1833, %v1832
  %v1835 = vmul.f32 %v1834, %v1833
  %v1836 = vmul.f32 0.5, %v1835
  %v1837 = vsub.f32 1.5, %v1836
  %v1838 = vmul.f32 %v1833, %v1837
  %vm1839 = vweird.f32 %v1832
  %vm1840 = vweird.f32 %v1833
  %vm1841 = vmor %vm1839, %vm1840
  %v1842 = vsel %vm1841, %v1833, %v1838
  %v1843 = vmul.f32 %v1828, %v1842
  %v1844 = vmul.f32 %v1829, %v1842
  %v1845 = vmul.f32 %v1830, %v1842
  %v1846 = vmul.f32 %v1831, %v1842
  %1848 = vset.pattern.permute.xlu0 0
  %1849 = vperm.xlu0 %1848, %v1798
  %v1850 = vpop.permute.xlu0 %1849
  %v1852 = vadd.f32 %v1843, %v1850
  %v1853 = vadd.f32 %v1844, %v1850
  %v1854 = vadd.f32 %v1845, %v1850
  %v1855 = vadd.f32 %v1846, %v1850
  %1856 = vst [vmem:[%s13] sm:$0xff] %v386
  %1857 = vst [vmem:[%s13 + $0x8] sm:$0xff] %v387
  %1858 = vst [vmem:[%s13 + $0x10] sm:$0xff] %v388
  %1859 = vst [vmem:[%s13 + $0x18] sm:$0xff] %v389
  %1860 = vst [vmem:[%s13 + $0x20] sm:$0xff] %v825
  %1861 = vst [vmem:[%s13 + $0x28] sm:$0xff] %v826
  %1862 = vst [vmem:[%s13 + $0x30] sm:$0xff] %v827
  %1863 = vst [vmem:[%s13 + $0x38] sm:$0xff] %v828
  %1864 = vst [vmem:[%s13 + $0x40] sm:$0xff] %v829
  %1865 = vst [vmem:[%s13 + $0x48] sm:$0xff] %v830
  %1866 = vst [vmem:[%s13 + $0x50] sm:$0xff] %v831
  %1867 = vst [vmem:[%s13 + $0x58] sm:$0xff] %v832
  %1868 = vst [vmem:[%s13 + $0x60] sm:$0xff] %v1629
  %1869 = vst [vmem:[%s13 + $0x68] sm:$0xff] %v1630
  %1870 = vst [vmem:[%s13 + $0x70] sm:$0xff] %v1631
  %1871 = vst [vmem:[%s13 + $0x78] sm:$0xff] %v1632
  %1872 = vst [vmem:[%s13 + $0x80] sm:$0xff] %v1852
  %1873 = vst [vmem:[%s13 + $0x88] sm:$0xff] %v1853
  %1874 = vst [vmem:[%s13 + $0x90] sm:$0xff] %v1854
  %1875 = vst [vmem:[%s13 + $0x98] sm:$0xff] %v1855
  // Predicated region
  $region54: #{inception_forward.1} parent=0 // pred_check
    _
  $region55: #{inception_forward.1} parent=0 // pred_check_branch
    %1877 = sbr.rel (0) target = $region57
  $region56: #{inception_forward.1} parent=0 // pred_region
    _
  $region57: #{inception_forward.1} parent=0 // pred_fallthru
    _
  // Predicated region
  $region58: #{inception_forward.1} parent=0 // pred_check
    _
  $region59: #{inception_forward.1} parent=0 // pred_check_branch
    %1879 = sbr.rel (0) target = $region61
  $region60: #{inception_forward.1} parent=0 // pred_region
    _
  $region61: #{inception_forward.1} parent=0 // pred_fallthru
    _

</llo_original>
